<compile_context>
chip_gen: v5e
topology: v5e:2x2
jax: 0.10.0
libtpu: 0.0.40
codegen_flags: <defaults>
</compile_context>

<pallas_src>
import math
import functools

import jax
import jax.numpy as jnp
from jax.experimental import pallas as pl
from jax.experimental.pallas import tpu as pltpu


# ----------------------------------------------------------------------------
# helpers
# ----------------------------------------------------------------------------

def _pick_tile(dim, candidates):
    """Largest candidate that evenly divides `dim`, else the full dim."""
    for c in candidates:
        if dim % c == 0:
            return c
    return dim


# ----------------------------------------------------------------------------
# Pallas kernels
# ----------------------------------------------------------------------------

def _linear_bias_kernel(x_ref, w_ref, b_ref, o_ref, acc_ref):
    # tiled (M, K) @ (K, N) + bias; bias only added at K-finalize.
    @pl.when(pl.program_id(2) == 0)
    def _():
        acc_ref[...] = jnp.zeros_like(acc_ref)

    acc_ref[...] += jnp.dot(x_ref[...].astype(jnp.bfloat16), w_ref[...],
                            preferred_element_type=jnp.float32)

    @pl.when(pl.program_id(2) == pl.num_programs(2) - 1)
    def _():
        o_ref[...] = acc_ref[...] + b_ref[...]


def _mix_matmul_kernel(x_ref, xx_ref, m_ref, w_ref, o_ref, acc_ref):
    # out = (x * m + xx * (1 - m)) @ W   (token-mix fused as matmul prologue)
    @pl.when(pl.program_id(2) == 0)
    def _():
        acc_ref[...] = jnp.zeros_like(acc_ref)

    m = m_ref[...]                                           # (1, tk) f32
    xm = x_ref[...] * m + xx_ref[...] * (1.0 - m)            # f32
    acc_ref[...] += jnp.dot(xm.astype(jnp.bfloat16), w_ref[...],
                            preferred_element_type=jnp.float32)

    @pl.when(pl.program_id(2) == pl.num_programs(2) - 1)
    def _():
        o_ref[...] = acc_ref[...]


def _layernorm_kernel(x_ref, g_ref, b_ref, o_ref):
    x = x_ref[...]
    mu = jnp.mean(x, axis=-1, keepdims=True)
    var = jnp.mean(jnp.square(x - mu), axis=-1, keepdims=True)
    o_ref[...] = (x - mu) * jax.lax.rsqrt(var + 1e-5) * g_ref[...] + b_ref[...]


def _ln_gate_matmul_kernel(y_ref, r_ref, g_ref, b_ref, w_ref, o_ref):
    # out = ( sigmoid(r) * LayerNorm(y) ) @ W    (spatial-mix output proj)
    y = y_ref[...]
    mu = jnp.mean(y, axis=-1, keepdims=True)
    var = jnp.mean(jnp.square(y - mu), axis=-1, keepdims=True)
    yn = (y - mu) * jax.lax.rsqrt(var + 1e-5) * g_ref[...] + b_ref[...]
    gated = jax.nn.sigmoid(r_ref[...]) * yn
    o_ref[...] = jnp.dot(gated.astype(jnp.bfloat16), w_ref[...],
                         preferred_element_type=jnp.float32)


def _relusq_ln_matmul_gate_kernel(k_ref, g_ref, b_ref, w_ref, r_ref, o_ref):
    # out = sigmoid(r) * ( LayerNorm(relu(k)^2) @ W )   (channel-mix value proj)
    k = jnp.square(jnp.maximum(k_ref[...], 0.0))
    mu = jnp.mean(k, axis=-1, keepdims=True)
    var = jnp.mean(jnp.square(k - mu), axis=-1, keepdims=True)
    kn = (k - mu) * jax.lax.rsqrt(var + 1e-5) * g_ref[...] + b_ref[...]
    kv = jnp.dot(kn.astype(jnp.bfloat16), w_ref[...],
                 preferred_element_type=jnp.float32)
    o_ref[...] = jax.nn.sigmoid(r_ref[...]) * kv


def _mean_tokens_kernel(x_ref, o_ref):
    # x_ref: (1, T, C) -> o_ref: (1, 1, C)
    o_ref[0] = jnp.mean(x_ref[0], axis=0, keepdims=True)


def _bi_wkv_scan_kernel(w_ref, u_ref, k_ref, v_ref, y_ref,
                        mf_ref, af_ref, bf_ref, ms_ref, as_ref, bs_ref):
    """Bidirectional WKV via forward + backward log-space scans (O(T*C)).

      y_t = ( sum_{i != t} e^{k_i - (|t-i|-1) w} v_i + e^{u + k_t} v_t )
          / ( sum_{i != t} e^{k_i - (|t-i|-1) w}     + e^{u + k_t}     )

    k/v/y blocks are (T, Bb, Cb) with the time axis leading so dynamic per-step
    indexing is on the untiled dimension.  Everything stays fp32.
    """
    T, Bb, Cb = k_ref.shape
    w = w_ref[...]                                   # (1, Cb)
    u = u_ref[...]                                   # (1, Cb)
    neg = jnp.full((Bb, Cb), -1e30, jnp.float32)
    zero = jnp.zeros((Bb, Cb), jnp.float32)

    # ---- forward exclusive-prefix states: state[t] == sum over i < t ----
    mf_ref[0] = neg
    af_ref[0] = zero
    bf_ref[0] = zero

    @pl.loop(0, T - 1)
    def _fwd(t):
        m = mf_ref[t]
        a = af_ref[t]
        b = bf_ref[t]
        kt = k_ref[t]
        vt = v_ref[t]
        md = m - w
        mn = jnp.maximum(md, kt)
        e1 = jnp.exp(md - mn)
        e2 = jnp.exp(kt - mn)
        mf_ref[t + 1] = mn
        af_ref[t + 1] = e1 * a + e2 * vt
        bf_ref[t + 1] = e1 * b + e2

    # ---- backward scan (sum over i > t) + combine with diagonal term ----
    ms_ref[...] = neg
    as_ref[...] = zero
    bs_ref[...] = zero

    @pl.loop(0, T)
    def _bwd(s):
        t = T - 1 - s
        kt = k_ref[t]
        vt = v_ref[t]
        mb = ms_ref[...]
        ab = as_ref[...]
        bb = bs_ref[...]
        mf = mf_ref[t]
        af = af_ref[t]
        bf = bf_ref[t]
        dd = u + kt
        mm = jnp.maximum(jnp.maximum(mf, mb), dd)
        ef = jnp.exp(mf - mm)
        eb = jnp.exp(mb - mm)
        ed = jnp.exp(dd - mm)
        num = ef * af + eb * ab + ed * vt
        den = ef * bf + eb * bb + ed
        y_ref[t] = num / den
        # absorb position t into the backward state (used at position t-1)
        md = mb - w
        mn = jnp.maximum(md, kt)
        e1 = jnp.exp(md - mn)
        e2 = jnp.exp(kt - mn)
        ms_ref[...] = mn
        as_ref[...] = e1 * ab + e2 * vt
        bs_ref[...] = e1 * bb + e2


# ----------------------------------------------------------------------------
# Pallas wrappers
# ----------------------------------------------------------------------------

def pallas_linear_bias(x, w, b):
    M, K = x.shape
    K2, N = w.shape
    assert K == K2
    tm = _pick_tile(M, (256, 128, 64, 32, 16, 8))
    tn = _pick_tile(N, (256, 128))
    tk = _pick_tile(K, (512, 256, 128))
    grid = (M // tm, N // tn, K // tk)
    return pl.pallas_call(
        _linear_bias_kernel,
        grid=grid,
        in_specs=[
            pl.BlockSpec((tm, tk), lambda i, j, k: (i, k)),
            pl.BlockSpec((tk, tn), lambda i, j, k: (k, j)),
            pl.BlockSpec((1, tn), lambda i, j, k: (0, j)),
        ],
        out_specs=pl.BlockSpec((tm, tn), lambda i, j, k: (i, j)),
        out_shape=jax.ShapeDtypeStruct((M, N), jnp.float32),
        scratch_shapes=[pltpu.VMEM((tm, tn), jnp.float32)],
        compiler_params=pltpu.CompilerParams(
            dimension_semantics=("parallel", "parallel", "arbitrary")),
    )(x, w.astype(jnp.bfloat16), b.reshape(1, N).astype(jnp.float32))


def pallas_mix_linear(x, xx, mix, w):
    M, K = x.shape
    K2, N = w.shape
    assert K == K2
    tm = _pick_tile(M, (256, 128, 64, 32, 16, 8))
    tn = _pick_tile(N, (256, 128))
    tk = _pick_tile(K, (512, 256, 128))
    grid = (M // tm, N // tn, K // tk)
    return pl.pallas_call(
        _mix_matmul_kernel,
        grid=grid,
        in_specs=[
            pl.BlockSpec((tm, tk), lambda i, j, k: (i, k)),
            pl.BlockSpec((tm, tk), lambda i, j, k: (i, k)),
            pl.BlockSpec((1, tk), lambda i, j, k: (0, k)),
            pl.BlockSpec((tk, tn), lambda i, j, k: (k, j)),
        ],
        out_specs=pl.BlockSpec((tm, tn), lambda i, j, k: (i, j)),
        out_shape=jax.ShapeDtypeStruct((M, N), jnp.float32),
        scratch_shapes=[pltpu.VMEM((tm, tn), jnp.float32)],
        compiler_params=pltpu.CompilerParams(
            dimension_semantics=("parallel", "parallel", "arbitrary")),
    )(x, xx, mix.reshape(1, K).astype(jnp.float32), w.astype(jnp.bfloat16))


def pallas_layernorm(x, g, b):
    M, C = x.shape
    tm = _pick_tile(M, (512, 256, 128, 64, 32, 16, 8))
    return pl.pallas_call(
        _layernorm_kernel,
        grid=(M // tm,),
        in_specs=[
            pl.BlockSpec((tm, C), lambda i: (i, 0)),
            pl.BlockSpec((1, C), lambda i: (0, 0)),
            pl.BlockSpec((1, C), lambda i: (0, 0)),
        ],
        out_specs=pl.BlockSpec((tm, C), lambda i: (i, 0)),
        out_shape=jax.ShapeDtypeStruct((M, C), jnp.float32),
        compiler_params=pltpu.CompilerParams(dimension_semantics=("parallel",)),
    )(x, g.reshape(1, C), b.reshape(1, C))


def pallas_ln_gate_matmul(y, r, g, b, w):
    M, C = y.shape
    C2, N = w.shape
    assert C == C2
    tm = _pick_tile(M, (256, 128, 64, 32, 16, 8))
    tn = _pick_tile(N, (256, 128))
    grid = (M // tm, N // tn)
    return pl.pallas_call(
        _ln_gate_matmul_kernel,
        grid=grid,
        in_specs=[
            pl.BlockSpec((tm, C), lambda i, j: (i, 0)),
            pl.BlockSpec((tm, C), lambda i, j: (i, 0)),
            pl.BlockSpec((1, C), lambda i, j: (0, 0)),
            pl.BlockSpec((1, C), lambda i, j: (0, 0)),
            pl.BlockSpec((C, tn), lambda i, j: (0, j)),
        ],
        out_specs=pl.BlockSpec((tm, tn), lambda i, j: (i, j)),
        out_shape=jax.ShapeDtypeStruct((M, N), jnp.float32),
        compiler_params=pltpu.CompilerParams(
            dimension_semantics=("parallel", "parallel")),
    )(y, r, g.reshape(1, C), b.reshape(1, C), w.astype(jnp.bfloat16))


def pallas_relusq_ln_matmul_gate(k, g, b, w, r):
    M, H = k.shape
    H2, N = w.shape
    assert H == H2
    tm = _pick_tile(M, (128, 64, 32, 16, 8))
    tn = _pick_tile(N, (256, 128))
    grid = (M // tm, N // tn)
    return pl.pallas_call(
        _relusq_ln_matmul_gate_kernel,
        grid=grid,
        in_specs=[
            pl.BlockSpec((tm, H), lambda i, j: (i, 0)),
            pl.BlockSpec((1, H), lambda i, j: (0, 0)),
            pl.BlockSpec((1, H), lambda i, j: (0, 0)),
            pl.BlockSpec((H, tn), lambda i, j: (0, j)),
            pl.BlockSpec((tm, tn), lambda i, j: (i, j)),
        ],
        out_specs=pl.BlockSpec((tm, tn), lambda i, j: (i, j)),
        out_shape=jax.ShapeDtypeStruct((M, N), jnp.float32),
        compiler_params=pltpu.CompilerParams(
            dimension_semantics=("parallel", "parallel")),
    )(k, g.reshape(1, H), b.reshape(1, H), w.astype(jnp.bfloat16), r)


def pallas_mean_tokens(x):
    B, T, C = x.shape
    out = pl.pallas_call(
        _mean_tokens_kernel,
        grid=(B,),
        in_specs=[pl.BlockSpec((1, T, C), lambda b: (b, 0, 0))],
        out_specs=pl.BlockSpec((1, 1, C), lambda b: (b, 0, 0)),
        out_shape=jax.ShapeDtypeStruct((B, 1, C), jnp.float32),
        compiler_params=pltpu.CompilerParams(dimension_semantics=("parallel",)),
    )(x)
    return out.reshape(B, C)


def pallas_bi_wkv(w, u, k, v):
    # w, u: (C,) already divided by T by the caller; k, v: (B, T, C) fp32.
    B, T, C = k.shape
    kt = jnp.transpose(k, (1, 0, 2))     # (T, B, C): time axis leading
    vt = jnp.transpose(v, (1, 0, 2))
    Cb = 128 if C % 128 == 0 else C
    Bb = 8 if B % 8 == 0 else B
    grid = (B // Bb, C // Cb)
    y = pl.pallas_call(
        _bi_wkv_scan_kernel,
        grid=grid,
        in_specs=[
            pl.BlockSpec((1, Cb), lambda b, c: (0, c)),
            pl.BlockSpec((1, Cb), lambda b, c: (0, c)),
            pl.BlockSpec((T, Bb, Cb), lambda b, c: (0, b, c)),
            pl.BlockSpec((T, Bb, Cb), lambda b, c: (0, b, c)),
        ],
        out_specs=pl.BlockSpec((T, Bb, Cb), lambda b, c: (0, b, c)),
        out_shape=jax.ShapeDtypeStruct((T, B, C), jnp.float32),
        scratch_shapes=[
            pltpu.VMEM((T, Bb, Cb), jnp.float32),   # m  (forward prefix)
            pltpu.VMEM((T, Bb, Cb), jnp.float32),   # a  (forward prefix num)
            pltpu.VMEM((T, Bb, Cb), jnp.float32),   # b  (forward prefix den)
            pltpu.VMEM((Bb, Cb), jnp.float32),      # backward running m
            pltpu.VMEM((Bb, Cb), jnp.float32),      # backward running a
            pltpu.VMEM((Bb, Cb), jnp.float32),      # backward running b
        ],
        compiler_params=pltpu.CompilerParams(
            dimension_semantics=("parallel", "parallel")),
    )(w.reshape(1, C).astype(jnp.float32),
      u.reshape(1, C).astype(jnp.float32), kt, vt)
    return jnp.transpose(y, (1, 0, 2))   # back to (B, T, C)


# ----------------------------------------------------------------------------
# Model pieces (glue in plain JAX, compute in Pallas)
# ----------------------------------------------------------------------------

def q_shift(x, shift_pixel, gamma, patch_resolution):
    """Quad-directional pixel shift, matching the PyTorch q_shift semantics."""
    B, N, C = x.shape
    H, W = patch_resolution
    s = shift_pixel
    g1, g2, g3, g4 = (int(C * gamma), int(C * gamma * 2),
                      int(C * gamma * 3), int(C * gamma * 4))
    xi = x.reshape(B, H, W, C)
    p0 = jnp.pad(xi[:, :, :W - s, 0:g1],  ((0, 0), (0, 0), (s, 0), (0, 0)))
    p1 = jnp.pad(xi[:, :, s:, g1:g2],     ((0, 0), (0, 0), (0, s), (0, 0)))
    p2 = jnp.pad(xi[:, :H - s, :, g2:g3], ((0, 0), (s, 0), (0, 0), (0, 0)))
    p3 = jnp.pad(xi[:, s:, :, g3:g4],     ((0, 0), (0, s), (0, 0), (0, 0)))
    rest = xi[:, :, :, g4:]
    out = jnp.concatenate([p0, p1, p2, p3, rest], axis=-1)
    return out.reshape(B, N, C)


def spatial_mix_forward(p, x, patch_resolution):
    B, T, C = x.shape
    xx = q_shift(x, 1, 0.25, patch_resolution)
    x2 = x.reshape(B * T, C)
    xx2 = xx.reshape(B * T, C)

    # token-mix fused into the projections (no xk/xv/xr HBM round trips)
    k = pallas_mix_linear(x2, xx2, p["mix_k"], p["key_w"]).reshape(B, T, C)
    v = pallas_mix_linear(x2, xx2, p["mix_v"], p["value_w"]).reshape(B, T, C)
    r = pallas_mix_linear(x2, xx2, p["mix_r"], p["recept_w"])       # (M, C)

    rwkv = pallas_bi_wkv(p["spatial_decay"] / T, p["spatial_first"] / T, k, v)

    # key_norm + sigmoid(r) gate fused as prologue of the output projection
    out = pallas_ln_gate_matmul(rwkv.reshape(B * T, C), r,
                                p["key_norm_g"], p["key_norm_b"], p["out_w"])
    return out.reshape(B, T, C)


def channel_mix_forward(p, x, patch_resolution):
    B, T, C = x.shape
    xx = q_shift(x, 1, 0.25, patch_resolution)
    x2 = x.reshape(B * T, C)
    xx2 = xx.reshape(B * T, C)

    k = pallas_mix_linear(x2, xx2, p["mix_k"], p["key_w"])          # (M, hidden)
    r = pallas_mix_linear(x2, xx2, p["mix_r"], p["recept_w"])       # (M, C)

    # relu^2 + key_norm fused as prologue, sigmoid gate as epilogue of value W
    out = pallas_relusq_ln_matmul_gate(k, p["key_norm_g"], p["key_norm_b"],
                                       p["value_w"], r)             # (M, C)
    return out.reshape(B, T, C)


def block_forward(p, x, patch_resolution, layer_id):
    B, T, C = x.shape

    def ln(t, g, b):
        return pallas_layernorm(t.reshape(B * T, C), g, b).reshape(B, T, C)

    if layer_id == 0:
        x = ln(x, p["ln0_g"], p["ln0_b"])
    # pre-norm, no layer-scale, no drop-path (defaults)
    x = x + spatial_mix_forward(p["att"], ln(x, p["ln1_g"], p["ln1_b"]),
                                patch_resolution)
    x = x + channel_mix_forward(p["ffn"], ln(x, p["ln2_g"], p["ln2_b"]),
                                patch_resolution)
    return x


def vrwkv_classification_forward(params, x_nchw, *, patch_size, embed_dims,
                                 depth, num_classes):
    B, Cin, H, W = x_nchw.shape
    p = patch_size
    Hp, Wp = H // p, W // p
    N = Hp * Wp
    C = embed_dims

    # PatchEmbed: Conv2d(k=stride=p) == patchify + matmul (weight order (Cin,kh,kw))
    xp = (x_nchw.reshape(B, Cin, Hp, p, Wp, p)
                .transpose(0, 2, 4, 1, 3, 5)
                .reshape(B * N, Cin * p * p))
    x = pallas_linear_bias(xp, params["patch_w"], params["patch_b"]).reshape(B, N, C)

    # pos-embed (same resolution -> resize is identity), dropout p=0 -> identity
    x = x + params["pos_embed"]

    for i in range(depth):
        x = block_forward(params["blocks"][i], x, (Hp, Wp), i)

    # final norm (final_norm=True)
    x = pallas_layernorm(x.reshape(B * N, C),
                         params["ln_f_g"], params["ln_f_b"]).reshape(B, N, C)

    # neck: GlobalAveragePooling over the patch grid == mean over tokens
    feat = pallas_mean_tokens(x)                       # (B, C)

    # head: single Linear (depth <= 12); pad output to a multiple of 128 lanes
    nc = num_classes
    npad = (-nc) % 128
    head_w = jnp.pad(params["head_w"], ((0, 0), (0, npad)))
    head_b = jnp.pad(params["head_b"], (0, npad))
    logits = pallas_linear_bias(feat, head_w, head_b)[:, :nc]
    return logits


# ----------------------------------------------------------------------------
# Deterministic parameter construction (synthetic; mimics the 'fancy' init for
# the RWKV-specific parameters; dense weights get small deterministic randoms)
# ----------------------------------------------------------------------------

def init_params(key, *, img_size, patch_size, in_channels, embed_dims, depth,
                hidden_rate, num_classes):
    Hp = Wp = img_size // patch_size
    N = Hp * Wp
    C = embed_dims
    keys = list(jax.random.split(key, 8 * depth + 8))
    kit = iter(keys)

    def lin(kin, kout, scale=0.05):
        return scale * jax.random.normal(next(kit), (kin, kout), jnp.float32)

    idx = jnp.arange(C, dtype=jnp.float32)
    x_lin = idx / C

    params = {
        "patch_w": lin(in_channels * patch_size * patch_size, C),
        "patch_b": 0.02 * jax.random.normal(next(kit), (C,), jnp.float32),
        "pos_embed": 0.02 * jax.random.normal(next(kit), (1, N, C), jnp.float32),
        "ln_f_g": jnp.ones((C,), jnp.float32),
        "ln_f_b": jnp.zeros((C,), jnp.float32),
        "head_w": lin(C, num_classes),
        "head_b": jnp.zeros((num_classes,), jnp.float32),
        "blocks": [],
    }

    for i in range(depth):
        r01 = i / (depth - 1)
        r1a0 = 1.0 - i / depth
        decay_speed = -5.0 + 8.0 * (idx / (C - 1)) ** (0.7 + 1.3 * r01)
        zigzag = (((jnp.arange(C) + 1) % 3) - 1).astype(jnp.float32) * 0.5
        spatial_first = jnp.ones((C,), jnp.float32) * math.log(0.3) + zigzag

        att = dict(
            spatial_decay=decay_speed.astype(jnp.float32),
            spatial_first=spatial_first,
            mix_k=(x_lin ** r1a0),
            mix_v=((x_lin ** r1a0) + 0.3 * r01),
            mix_r=(x_lin ** (0.5 * r1a0)),
            key_w=lin(C, C), value_w=lin(C, C),
            recept_w=lin(C, C), out_w=lin(C, C),
            key_norm_g=jnp.ones((C,), jnp.float32),
            key_norm_b=jnp.zeros((C,), jnp.float32),
        )
        hidden = hidden_rate * C
        ffn = dict(
            mix_k=(x_lin ** r1a0),
            mix_r=(x_lin ** r1a0),
            key_w=lin(C, hidden), value_w=lin(hidden, C), recept_w=lin(C, C),
            key_norm_g=jnp.ones((hidden,), jnp.float32),
            key_norm_b=jnp.zeros((hidden,), jnp.float32),
        )
        blk = dict(
            att=att, ffn=ffn,
            ln1_g=jnp.ones((C,), jnp.float32), ln1_b=jnp.zeros((C,), jnp.float32),
            ln2_g=jnp.ones((C,), jnp.float32), ln2_b=jnp.zeros((C,), jnp.float32),
        )
        if i == 0:
            blk["ln0_g"] = jnp.ones((C,), jnp.float32)
            blk["ln0_b"] = jnp.zeros((C,), jnp.float32)
        params["blocks"].append(blk)

    return params


# ----------------------------------------------------------------------------

if __name__ == "__main__":
    cfg = dict(img_size=16, patch_size=4, in_channels=3, embed_dims=32,
               depth=2, hidden_rate=4, num_classes=10)

    key = jax.random.PRNGKey(0)
    pkey, xkey = jax.random.split(key)
    params = init_params(pkey, **cfg)

    # NCHW input, like the PyTorch module.
    x = jax.random.normal(
        xkey, (2, cfg["in_channels"], cfg["img_size"], cfg["img_size"]),
        jnp.float32)

    fwd = jax.jit(functools.partial(
        vrwkv_classification_forward,
        patch_size=cfg["patch_size"], embed_dims=cfg["embed_dims"],
        depth=cfg["depth"], num_classes=cfg["num_classes"]))

    logits = fwd(params, x)
    jax.block_until_ready(logits)
    assert logits.shape == (2, cfg["num_classes"])
    assert bool(jnp.all(jnp.isfinite(logits)))
    print("KERNEL_OK")
</pallas_src>

<mosaic_0001>
module attributes {stable_mosaic.version = 11 : i64} {
  func.func @_linear_bias_kernel(%arg0: i32, %arg1: i32, %arg2: i32, %arg3: memref<32x48xf32, #tpu.memory_space<vmem>>, %arg4: memref<48x32xbf16, #tpu.memory_space<vmem>>, %arg5: memref<1x32xf32, #tpu.memory_space<vmem>>, %arg6: memref<32x32xf32, #tpu.memory_space<vmem>>, %arg7: memref<32x32xf32, #tpu.memory_space<vmem>>) attributes {dimension_semantics = [#tpu.dimension_semantics<parallel>, #tpu.dimension_semantics<parallel>, #tpu.dimension_semantics<arbitrary>], iteration_bounds = array<i64: 1, 1, 1>, scalar_prefetch = 0 : i64, scratch_operands = 1 : i64, tpu.core_type = #tpu.core_type<tc>, window_params = [{transform_indices = @transform_0, window_bounds = array<i64: 32, 48>}, {transform_indices = @transform_1, window_bounds = array<i64: 48, 32>}, {transform_indices = @transform_2, window_bounds = array<i64: 1, 32>}, {transform_indices = @transform_3, window_bounds = array<i64: 32, 32>}]} {
    %c0_i32 = arith.constant 0 : i32
    %0 = arith.cmpi eq, %arg2, %c0_i32 : i32
    %1 = arith.extui %0 : i1 to i32
    %c0_i32_0 = arith.constant 0 : i32
    %2 = arith.cmpi ne, %1, %c0_i32_0 : i32
    scf.if %2 {
      %cst_10 = arith.constant 0.000000e+00 : f32
      %13 = vector.broadcast %cst_10 : f32 to vector<32x32xf32>
      %c0_11 = arith.constant 0 : index
      %c0_12 = arith.constant 0 : index
      %14 = vector.load %arg7[%c0_11, %c0_12] : memref<32x32xf32, #tpu.memory_space<vmem>>, vector<32x32xf32>
      tpu.vector_store %arg7[%c0_11, %c0_12], %13 {strides = array<i32>} : memref<32x32xf32, #tpu.memory_space<vmem>>, vector<32x32xf32>,
    } else {
    }
    %c0 = arith.constant 0 : index
    %c0_1 = arith.constant 0 : index
    %3 = vector.load %arg7[%c0, %c0_1] : memref<32x32xf32, #tpu.memory_space<vmem>>, vector<32x32xf32>
    %c0_2 = arith.constant 0 : index
    %c0_3 = arith.constant 0 : index
    %4 = vector.load %arg3[%c0_2, %c0_3] : memref<32x48xf32, #tpu.memory_space<vmem>>, vector<32x48xf32>
    %5 = arith.truncf %4 : vector<32x48xf32> to vector<32x48xbf16>
    %c0_4 = arith.constant 0 : index
    %c0_5 = arith.constant 0 : index
    %6 = vector.load %arg4[%c0_4, %c0_5] : memref<48x32xbf16, #tpu.memory_space<vmem>>, vector<48x32xbf16>
    %cst = arith.constant dense<0.000000e+00> : vector<32x32xf32>
    %7 = tpu.matmul %5, %6, %cst {dimension_numbers = #tpu.dot_dimension_numbers<[1], [0], [0], [1], [0, 0, 1, 1], [], []>} : vector<32x48xbf16>, vector<48x32xbf16>, vector<32x32xf32> -> vector<32x32xf32>
    %8 = arith.addf %3, %7 : vector<32x32xf32>
    %c0_6 = arith.constant 0 : index
    %c0_7 = arith.constant 0 : index
    %9 = vector.load %arg7[%c0_6, %c0_7] : memref<32x32xf32, #tpu.memory_space<vmem>>, vector<32x32xf32>
    tpu.vector_store %arg7[%c0_6, %c0_7], %8 {strides = array<i32>} : memref<32x32xf32, #tpu.memory_space<vmem>>, vector<32x32xf32>,
    %c0_i32_8 = arith.constant 0 : i32
    %10 = arith.cmpi eq, %arg2, %c0_i32_8 : i32
    %11 = arith.extui %10 : i1 to i32
    %c0_i32_9 = arith.constant 0 : i32
    %12 = arith.cmpi ne, %11, %c0_i32_9 : i32
    scf.if %12 {
      %c0_10 = arith.constant 0 : index
      %c0_11 = arith.constant 0 : index
      %13 = vector.load %arg7[%c0_10, %c0_11] : memref<32x32xf32, #tpu.memory_space<vmem>>, vector<32x32xf32>
      %c0_12 = arith.constant 0 : index
      %c0_13 = arith.constant 0 : index
      %14 = vector.load %arg5[%c0_12, %c0_13] : memref<1x32xf32, #tpu.memory_space<vmem>>, vector<1x32xf32>
      %15 = vector.broadcast %14 : vector<1x32xf32> to vector<32x32xf32>
      %16 = arith.addf %13, %15 : vector<32x32xf32>
      %c0_14 = arith.constant 0 : index
      %c0_15 = arith.constant 0 : index
      %17 = vector.load %arg6[%c0_14, %c0_15] : memref<32x32xf32, #tpu.memory_space<vmem>>, vector<32x32xf32>
      tpu.vector_store %arg6[%c0_14, %c0_15], %16 {strides = array<i32>} : memref<32x32xf32, #tpu.memory_space<vmem>>, vector<32x32xf32>,
    } else {
    }
    return
  }
  func.func @transform_0(%arg0: i32, %arg1: i32, %arg2: i32) -> (i32, i32) {
    %c0_i32 = arith.constant 0 : i32
    return %arg0, %arg2 : i32, i32
  }
  func.func @transform_1(%arg0: i32, %arg1: i32, %arg2: i32) -> (i32, i32) {
    %c0_i32 = arith.constant 0 : i32
    return %arg2, %arg1 : i32, i32
  }
  func.func @transform_2(%arg0: i32, %arg1: i32, %arg2: i32) -> (i32, i32) {
    %c0_i32 = arith.constant 0 : i32
    %c0_i32_0 = arith.constant 0 : i32
    return %c0_i32, %arg1 : i32, i32
  }
  func.func @transform_3(%arg0: i32, %arg1: i32, %arg2: i32) -> (i32, i32) {
    %c0_i32 = arith.constant 0 : i32
    return %arg0, %arg1 : i32, i32
  }
}

module attributes {stable_mosaic.version = 11 : i64} {
  func.func @_layernorm_kernel(%arg0: i32, %arg1: memref<32x32xf32, #tpu.memory_space<vmem>>, %arg2: memref<1x32xf32, #tpu.memory_space<vmem>>, %arg3: memref<1x32xf32, #tpu.memory_space<vmem>>, %arg4: memref<32x32xf32, #tpu.memory_space<vmem>>) attributes {dimension_semantics = [#tpu.dimension_semantics<parallel>], iteration_bounds = array<i64: 1>, scalar_prefetch = 0 : i64, scratch_operands = 0 : i64, tpu.core_type = #tpu.core_type<tc>, window_params = [{transform_indices = @transform_0, window_bounds = array<i64: 32, 32>}, {pipeline_mode = #tpu.pipeline_mode<synchronous>, transform_indices = @transform_1, window_bounds = array<i64: 1, 32>}, {pipeline_mode = #tpu.pipeline_mode<synchronous>, transform_indices = @transform_2, window_bounds = array<i64: 1, 32>}, {transform_indices = @transform_3, window_bounds = array<i64: 32, 32>}]} {
    %c0 = arith.constant 0 : index
    %c0_0 = arith.constant 0 : index
    %0 = vector.load %arg1[%c0, %c0_0] : memref<32x32xf32, #tpu.memory_space<vmem>>, vector<32x32xf32>
    %cst = arith.constant dense<0.000000e+00> : vector<32xf32>
    %1 = vector.multi_reduction <add>, %0, %cst [1] : vector<32x32xf32> to vector<32xf32>
    %2 = vector.shape_cast %1 : vector<32xf32> to vector<32x1xf32>
    %cst_1 = arith.constant 3.200000e+01 : f32
    %3 = vector.broadcast %cst_1 : f32 to vector<32x1xf32>
    %4 = arith.divf %2, %3 : vector<32x1xf32>
    %5 = vector.broadcast %4 : vector<32x1xf32> to vector<32x32xf32>
    %6 = arith.subf %0, %5 : vector<32x32xf32>
    %7 = arith.mulf %6, %6 : vector<32x32xf32>
    %cst_2 = arith.constant dense<0.000000e+00> : vector<32xf32>
    %8 = vector.multi_reduction <add>, %7, %cst_2 [1] : vector<32x32xf32> to vector<32xf32>
    %9 = vector.shape_cast %8 : vector<32xf32> to vector<32x1xf32>
    %cst_3 = arith.constant 3.200000e+01 : f32
    %10 = vector.broadcast %cst_3 : f32 to vector<32x1xf32>
    %11 = arith.divf %9, %10 : vector<32x1xf32>
    %12 = vector.broadcast %4 : vector<32x1xf32> to vector<32x32xf32>
    %13 = arith.subf %0, %12 : vector<32x32xf32>
    %cst_4 = arith.constant 9.99999974E-6 : f32
    %14 = vector.broadcast %cst_4 : f32 to vector<32x1xf32>
    %15 = arith.addf %11, %14 : vector<32x1xf32>
    %16 = math.rsqrt %15 : vector<32x1xf32>
    %17 = vector.broadcast %16 : vector<32x1xf32> to vector<32x32xf32>
    %18 = arith.mulf %13, %17 : vector<32x32xf32>
    %c0_5 = arith.constant 0 : index
    %c0_6 = arith.constant 0 : index
    %19 = vector.load %arg2[%c0_5, %c0_6] : memref<1x32xf32, #tpu.memory_space<vmem>>, vector<1x32xf32>
    %20 = vector.broadcast %19 : vector<1x32xf32> to vector<32x32xf32>
    %21 = arith.mulf %18, %20 : vector<32x32xf32>
    %c0_7 = arith.constant 0 : index
    %c0_8 = arith.constant 0 : index
    %22 = vector.load %arg3[%c0_7, %c0_8] : memref<1x32xf32, #tpu.memory_space<vmem>>, vector<1x32xf32>
    %23 = vector.broadcast %22 : vector<1x32xf32> to vector<32x32xf32>
    %24 = arith.addf %21, %23 : vector<32x32xf32>
    %c0_9 = arith.constant 0 : index
    %c0_10 = arith.constant 0 : index
    %25 = vector.load %arg4[%c0_9, %c0_10] : memref<32x32xf32, #tpu.memory_space<vmem>>, vector<32x32xf32>
    tpu.vector_store %arg4[%c0_9, %c0_10], %24 {strides = array<i32>} : memref<32x32xf32, #tpu.memory_space<vmem>>, vector<32x32xf32>,
    return
  }
  func.func @transform_0(%arg0: i32) -> (i32, i32) {
    %c0_i32 = arith.constant 0 : i32
    %c0_i32_0 = arith.constant 0 : i32
    return %arg0, %c0_i32 : i32, i32
  }
  func.func @transform_1(%arg0: i32) -> (i32, i32) {
    %c0_i32 = arith.constant 0 : i32
    %c0_i32_0 = arith.constant 0 : i32
    %c0_i32_1 = arith.constant 0 : i32
    return %c0_i32, %c0_i32_0 : i32, i32
  }
  func.func @transform_2(%arg0: i32) -> (i32, i32) {
    %c0_i32 = arith.constant 0 : i32
    %c0_i32_0 = arith.constant 0 : i32
    %c0_i32_1 = arith.constant 0 : i32
    return %c0_i32, %c0_i32_0 : i32, i32
  }
  func.func @transform_3(%arg0: i32) -> (i32, i32) {
    %c0_i32 = arith.constant 0 : i32
    %c0_i32_0 = arith.constant 0 : i32
    return %arg0, %c0_i32 : i32, i32
  }
}

module attributes {stable_mosaic.version = 11 : i64} {
  func.func @_mix_matmul_kernel(%arg0: i32, %arg1: i32, %arg2: i32, %arg3: memref<32x32xf32, #tpu.memory_space<vmem>>, %arg4: memref<32x32xf32, #tpu.memory_space<vmem>>, %arg5: memref<1x32xf32, #tpu.memory_space<vmem>>, %arg6: memref<32x32xbf16, #tpu.memory_space<vmem>>, %arg7: memref<32x32xf32, #tpu.memory_space<vmem>>, %arg8: memref<32x32xf32, #tpu.memory_space<vmem>>) attributes {dimension_semantics = [#tpu.dimension_semantics<parallel>, #tpu.dimension_semantics<parallel>, #tpu.dimension_semantics<arbitrary>], iteration_bounds = array<i64: 1, 1, 1>, scalar_prefetch = 0 : i64, scratch_operands = 1 : i64, tpu.core_type = #tpu.core_type<tc>, window_params = [{transform_indices = @transform_0, window_bounds = array<i64: 32, 32>}, {transform_indices = @transform_1, window_bounds = array<i64: 32, 32>}, {transform_indices = @transform_2, window_bounds = array<i64: 1, 32>}, {transform_indices = @transform_3, window_bounds = array<i64: 32, 32>}, {transform_indices = @transform_4, window_bounds = array<i64: 32, 32>}]} {
    %c0_i32 = arith.constant 0 : i32
    %0 = arith.cmpi eq, %arg2, %c0_i32 : i32
    %1 = arith.extui %0 : i1 to i32
    %c0_i32_0 = arith.constant 0 : i32
    %2 = arith.cmpi ne, %1, %c0_i32_0 : i32
    scf.if %2 {
      %cst_15 = arith.constant 0.000000e+00 : f32
      %22 = vector.broadcast %cst_15 : f32 to vector<32x32xf32>
      %c0_16 = arith.constant 0 : index
      %c0_17 = arith.constant 0 : index
      %23 = vector.load %arg8[%c0_16, %c0_17] : memref<32x32xf32, #tpu.memory_space<vmem>>, vector<32x32xf32>
      tpu.vector_store %arg8[%c0_16, %c0_17], %22 {strides = array<i32>} : memref<32x32xf32, #tpu.memory_space<vmem>>, vector<32x32xf32>,
    } else {
    }
    %c0 = arith.constant 0 : index
    %c0_1 = arith.constant 0 : index
    %3 = vector.load %arg5[%c0, %c0_1] : memref<1x32xf32, #tpu.memory_space<vmem>>, vector<1x32xf32>
    %c0_2 = arith.constant 0 : index
    %c0_3 = arith.constant 0 : index
    %4 = vector.load %arg3[%c0_2, %c0_3] : memref<32x32xf32, #tpu.memory_space<vmem>>, vector<32x32xf32>
    %5 = vector.broadcast %3 : vector<1x32xf32> to vector<32x32xf32>
    %6 = arith.mulf %4, %5 : vector<32x32xf32>
    %c0_4 = arith.constant 0 : index
    %c0_5 = arith.constant 0 : index
    %7 = vector.load %arg4[%c0_4, %c0_5] : memref<32x32xf32, #tpu.memory_space<vmem>>, vector<32x32xf32>
    %cst = arith.constant 1.000000e+00 : f32
    %8 = vector.broadcast %cst : f32 to vector<1x32xf32>
    %9 = arith.subf %8, %3 : vector<1x32xf32>
    %10 = vector.broadcast %9 : vector<1x32xf32> to vector<32x32xf32>
    %11 = arith.mulf %7, %10 : vector<32x32xf32>
    %12 = arith.addf %6, %11 : vector<32x32xf32>
    %c0_6 = arith.constant 0 : index
    %c0_7 = arith.constant 0 : index
    %13 = vector.load %arg8[%c0_6, %c0_7] : memref<32x32xf32, #tpu.memory_space<vmem>>, vector<32x32xf32>
    %14 = arith.truncf %12 : vector<32x32xf32> to vector<32x32xbf16>
    %c0_8 = arith.constant 0 : index
    %c0_9 = arith.constant 0 : index
    %15 = vector.load %arg6[%c0_8, %c0_9] : memref<32x32xbf16, #tpu.memory_space<vmem>>, vector<32x32xbf16>
    %cst_10 = arith.constant dense<0.000000e+00> : vector<32x32xf32>
    %16 = tpu.matmul %14, %15, %cst_10 {dimension_numbers = #tpu.dot_dimension_numbers<[1], [0], [0], [1], [0, 0, 1, 1], [], []>} : vector<32x32xbf16>, vector<32x32xbf16>, vector<32x32xf32> -> vector<32x32xf32>
    %17 = arith.addf %13, %16 : vector<32x32xf32>
    %c0_11 = arith.constant 0 : index
    %c0_12 = arith.constant 0 : index
    %18 = vector.load %arg8[%c0_11, %c0_12] : memref<32x32xf32, #tpu.memory_space<vmem>>, vector<32x32xf32>
    tpu.vector_store %arg8[%c0_11, %c0_12], %17 {strides = array<i32>} : memref<32x32xf32, #tpu.memory_space<vmem>>, vector<32x32xf32>,
    %c0_i32_13 = arith.constant 0 : i32
    %19 = arith.cmpi eq, %arg2, %c0_i32_13 : i32
    %20 = arith.extui %19 : i1 to i32
    %c0_i32_14 = arith.constant 0 : i32
    %21 = arith.cmpi ne, %20, %c0_i32_14 : i32
    scf.if %21 {
      %c0_15 = arith.constant 0 : index
      %c0_16 = arith.constant 0 : index
      %22 = vector.load %arg8[%c0_15, %c0_16] : memref<32x32xf32, #tpu.memory_space<vmem>>, vector<32x32xf32>
      %c0_17 = arith.constant 0 : index
      %c0_18 = arith.constant 0 : index
      %23 = vector.load %arg7[%c0_17, %c0_18] : memref<32x32xf32, #tpu.memory_space<vmem>>, vector<32x32xf32>
      tpu.vector_store %arg7[%c0_17, %c0_18], %22 {strides = array<i32>} : memref<32x32xf32, #tpu.memory_space<vmem>>, vector<32x32xf32>,
    } else {
    }
    return
  }
  func.func @transform_0(%arg0: i32, %arg1: i32, %arg2: i32) -> (i32, i32) {
    %c0_i32 = arith.constant 0 : i32
    return %arg0, %arg2 : i32, i32
  }
  func.func @transform_1(%arg0: i32, %arg1: i32, %arg2: i32) -> (i32, i32) {
    %c0_i32 = arith.constant 0 : i32
    return %arg0, %arg2 : i32, i32
  }
  func.func @transform_2(%arg0: i32, %arg1: i32, %arg2: i32) -> (i32, i32) {
    %c0_i32 = arith.constant 0 : i32
    %c0_i32_0 = arith.constant 0 : i32
    return %c0_i32, %arg2 : i32, i32
  }
  func.func @transform_3(%arg0: i32, %arg1: i32, %arg2: i32) -> (i32, i32) {
    %c0_i32 = arith.constant 0 : i32
    return %arg2, %arg1 : i32, i32
  }
  func.func @transform_4(%arg0: i32, %arg1: i32, %arg2: i32) -> (i32, i32) {
    %c0_i32 = arith.constant 0 : i32
    return %arg0, %arg1 : i32, i32
  }
}

module attributes {stable_mosaic.version = 11 : i64} {
  func.func @_bi_wkv_scan_kernel(%arg0: i32, %arg1: i32, %arg2: memref<1x32xf32, #tpu.memory_space<vmem>>, %arg3: memref<1x32xf32, #tpu.memory_space<vmem>>, %arg4: memref<16x2x32xf32, #tpu.memory_space<vmem>>, %arg5: memref<16x2x32xf32, #tpu.memory_space<vmem>>, %arg6: memref<16x2x32xf32, #tpu.memory_space<vmem>>, %arg7: memref<16x2x32xf32, #tpu.memory_space<vmem>>, %arg8: memref<16x2x32xf32, #tpu.memory_space<vmem>>, %arg9: memref<16x2x32xf32, #tpu.memory_space<vmem>>, %arg10: memref<2x32xf32, #tpu.memory_space<vmem>>, %arg11: memref<2x32xf32, #tpu.memory_space<vmem>>, %arg12: memref<2x32xf32, #tpu.memory_space<vmem>>) attributes {dimension_semantics = [#tpu.dimension_semantics<parallel>, #tpu.dimension_semantics<parallel>], iteration_bounds = array<i64: 1, 1>, scalar_prefetch = 0 : i64, scratch_operands = 6 : i64, tpu.core_type = #tpu.core_type<tc>, window_params = [{transform_indices = @transform_0, window_bounds = array<i64: 1, 32>}, {transform_indices = @transform_1, window_bounds = array<i64: 1, 32>}, {transform_indices = @transform_2, window_bounds = array<i64: 16, 2, 32>}, {transform_indices = @transform_3, window_bounds = array<i64: 16, 2, 32>}, {transform_indices = @transform_4, window_bounds = array<i64: 16, 2, 32>}]} {
    %c0 = arith.constant 0 : index
    %c0_0 = arith.constant 0 : index
    %0 = vector.load %arg2[%c0, %c0_0] : memref<1x32xf32, #tpu.memory_space<vmem>>, vector<1x32xf32>
    %c0_1 = arith.constant 0 : index
    %c0_2 = arith.constant 0 : index
    %1 = vector.load %arg3[%c0_1, %c0_2] : memref<1x32xf32, #tpu.memory_space<vmem>>, vector<1x32xf32>
    %cst = arith.constant -1.000000e+30 : f32
    %2 = vector.broadcast %cst : f32 to vector<2x32xf32>
    %cst_3 = arith.constant 0.000000e+00 : f32
    %3 = vector.broadcast %cst_3 : f32 to vector<2x32xf32>
    %c0_4 = arith.constant 0 : index
    %c0_5 = arith.constant 0 : index
    %c0_6 = arith.constant 0 : index
    %4 = vector.load %arg7[%c0_4, %c0_5, %c0_6] : memref<16x2x32xf32, #tpu.memory_space<vmem>>, vector<1x2x32xf32>
    %5 = vector.shape_cast %4 : vector<1x2x32xf32> to vector<2x32xf32>
    %6 = vector.shape_cast %2 : vector<2x32xf32> to vector<1x2x32xf32>
    tpu.vector_store %arg7[%c0_4, %c0_5, %c0_6], %6 {strides = array<i32>} : memref<16x2x32xf32, #tpu.memory_space<vmem>>, vector<1x2x32xf32>,
    %c0_7 = arith.constant 0 : index
    %c0_8 = arith.constant 0 : index
    %c0_9 = arith.constant 0 : index
    %7 = vector.load %arg8[%c0_7, %c0_8, %c0_9] : memref<16x2x32xf32, #tpu.memory_space<vmem>>, vector<1x2x32xf32>
    %8 = vector.shape_cast %7 : vector<1x2x32xf32> to vector<2x32xf32>
    %9 = vector.shape_cast %3 : vector<2x32xf32> to vector<1x2x32xf32>
    tpu.vector_store %arg8[%c0_7, %c0_8, %c0_9], %9 {strides = array<i32>} : memref<16x2x32xf32, #tpu.memory_space<vmem>>, vector<1x2x32xf32>,
    %c0_10 = arith.constant 0 : index
    %c0_11 = arith.constant 0 : index
    %c0_12 = arith.constant 0 : index
    %10 = vector.load %arg9[%c0_10, %c0_11, %c0_12] : memref<16x2x32xf32, #tpu.memory_space<vmem>>, vector<1x2x32xf32>
    %11 = vector.shape_cast %10 : vector<1x2x32xf32> to vector<2x32xf32>
    %12 = vector.shape_cast %3 : vector<2x32xf32> to vector<1x2x32xf32>
    tpu.vector_store %arg9[%c0_10, %c0_11, %c0_12], %12 {strides = array<i32>} : memref<16x2x32xf32, #tpu.memory_space<vmem>>, vector<1x2x32xf32>,
    %c0_i32 = arith.constant 0 : i32
    %c15_i32 = arith.constant 15 : i32
    %13 = arith.addi %c0_i32, %c15_i32 : i32
    %c1_i32 = arith.constant 1 : i32
    scf.for %arg13 = %c0_i32 to %13 step %c1_i32  : i32 {
      %c1_i32_23 = arith.constant 1 : i32
      %18 = arith.muli %arg13, %c1_i32_23 : i32
      %c0_i32_24 = arith.constant 0 : i32
      %19 = arith.addi %c0_i32_24, %18 : i32
      %20 = arith.index_cast %19 : i32 to index
      %c0_25 = arith.constant 0 : index
      %c0_26 = arith.constant 0 : index
      %21 = vector.load %arg7[%20, %c0_25, %c0_26] : memref<16x2x32xf32, #tpu.memory_space<vmem>>, vector<1x2x32xf32>
      %22 = vector.shape_cast %21 : vector<1x2x32xf32> to vector<2x32xf32>
      %23 = arith.index_cast %19 : i32 to index
      %c0_27 = arith.constant 0 : index
      %c0_28 = arith.constant 0 : index
      %24 = vector.load %arg8[%23, %c0_27, %c0_28] : memref<16x2x32xf32, #tpu.memory_space<vmem>>, vector<1x2x32xf32>
      %25 = vector.shape_cast %24 : vector<1x2x32xf32> to vector<2x32xf32>
      %26 = arith.index_cast %19 : i32 to index
      %c0_29 = arith.constant 0 : index
      %c0_30 = arith.constant 0 : index
      %27 = vector.load %arg9[%26, %c0_29, %c0_30] : memref<16x2x32xf32, #tpu.memory_space<vmem>>, vector<1x2x32xf32>
      %28 = vector.shape_cast %27 : vector<1x2x32xf32> to vector<2x32xf32>
      %29 = arith.index_cast %19 : i32 to index
      %c0_31 = arith.constant 0 : index
      %c0_32 = arith.constant 0 : index
      %30 = vector.load %arg4[%29, %c0_31, %c0_32] : memref<16x2x32xf32, #tpu.memory_space<vmem>>, vector<1x2x32xf32>
      %31 = vector.shape_cast %30 : vector<1x2x32xf32> to vector<2x32xf32>
      %32 = arith.index_cast %19 : i32 to index
      %c0_33 = arith.constant 0 : index
      %c0_34 = arith.constant 0 : index
      %33 = vector.load %arg5[%32, %c0_33, %c0_34] : memref<16x2x32xf32, #tpu.memory_space<vmem>>, vector<1x2x32xf32>
      %34 = vector.shape_cast %33 : vector<1x2x32xf32> to vector<2x32xf32>
      %35 = vector.broadcast %0 : vector<1x32xf32> to vector<2x32xf32>
      %36 = arith.subf %22, %35 : vector<2x32xf32>
      %37 = arith.maximumf %36, %31 : vector<2x32xf32>
      %38 = arith.subf %36, %37 : vector<2x32xf32>
      %39 = math.exp %38 : vector<2x32xf32>
      %40 = arith.subf %31, %37 : vector<2x32xf32>
      %41 = math.exp %40 : vector<2x32xf32>
      %c1_i32_35 = arith.constant 1 : i32
      %42 = arith.addi %19, %c1_i32_35 : i32
      %43 = arith.index_cast %42 : i32 to index
      %c0_36 = arith.constant 0 : index
      %c0_37 = arith.constant 0 : index
      %44 = vector.load %arg7[%43, %c0_36, %c0_37] : memref<16x2x32xf32, #tpu.memory_space<vmem>>, vector<1x2x32xf32>
      %45 = vector.shape_cast %44 : vector<1x2x32xf32> to vector<2x32xf32>
      %46 = vector.shape_cast %37 : vector<2x32xf32> to vector<1x2x32xf32>
      tpu.vector_store %arg7[%43, %c0_36, %c0_37], %46 {strides = array<i32>} : memref<16x2x32xf32, #tpu.memory_space<vmem>>, vector<1x2x32xf32>,
      %47 = arith.mulf %39, %25 : vector<2x32xf32>
      %48 = arith.mulf %41, %34 : vector<2x32xf32>
      %49 = arith.addf %47, %48 : vector<2x32xf32>
      %c1_i32_38 = arith.constant 1 : i32
      %50 = arith.addi %19, %c1_i32_38 : i32
      %51 = arith.index_cast %50 : i32 to index
      %c0_39 = arith.constant 0 : index
      %c0_40 = arith.constant 0 : index
      %52 = vector.load %arg8[%51, %c0_39, %c0_40] : memref<16x2x32xf32, #tpu.memory_space<vmem>>, vector<1x2x32xf32>
      %53 = vector.shape_cast %52 : vector<1x2x32xf32> to vector<2x32xf32>
      %54 = vector.shape_cast %49 : vector<2x32xf32> to vector<1x2x32xf32>
      tpu.vector_store %arg8[%51, %c0_39, %c0_40], %54 {strides = array<i32>} : memref<16x2x32xf32, #tpu.memory_space<vmem>>, vector<1x2x32xf32>,
      %55 = arith.mulf %39, %28 : vector<2x32xf32>
      %56 = arith.addf %55, %41 : vector<2x32xf32>
      %c1_i32_41 = arith.constant 1 : i32
      %57 = arith.addi %19, %c1_i32_41 : i32
      %58 = arith.index_cast %57 : i32 to index
      %c0_42 = arith.constant 0 : index
      %c0_43 = arith.constant 0 : index
      %59 = vector.load %arg9[%58, %c0_42, %c0_43] : memref<16x2x32xf32, #tpu.memory_space<vmem>>, vector<1x2x32xf32>
      %60 = vector.shape_cast %59 : vector<1x2x32xf32> to vector<2x32xf32>
      %61 = vector.shape_cast %56 : vector<2x32xf32> to vector<1x2x32xf32>
      tpu.vector_store %arg9[%58, %c0_42, %c0_43], %61 {strides = array<i32>} : memref<16x2x32xf32, #tpu.memory_space<vmem>>, vector<1x2x32xf32>,
    }
    %c15_i32_13 = arith.constant 15 : i32
    %c0_14 = arith.constant 0 : index
    %c0_15 = arith.constant 0 : index
    %14 = vector.load %arg10[%c0_14, %c0_15] : memref<2x32xf32, #tpu.memory_space<vmem>>, vector<2x32xf32>
    tpu.vector_store %arg10[%c0_14, %c0_15], %2 {strides = array<i32>} : memref<2x32xf32, #tpu.memory_space<vmem>>, vector<2x32xf32>,
    %c0_16 = arith.constant 0 : index
    %c0_17 = arith.constant 0 : index
    %15 = vector.load %arg11[%c0_16, %c0_17] : memref<2x32xf32, #tpu.memory_space<vmem>>, vector<2x32xf32>
    tpu.vector_store %arg11[%c0_16, %c0_17], %3 {strides = array<i32>} : memref<2x32xf32, #tpu.memory_space<vmem>>, vector<2x32xf32>,
    %c0_18 = arith.constant 0 : index
    %c0_19 = arith.constant 0 : index
    %16 = vector.load %arg12[%c0_18, %c0_19] : memref<2x32xf32, #tpu.memory_space<vmem>>, vector<2x32xf32>
    tpu.vector_store %arg12[%c0_18, %c0_19], %3 {strides = array<i32>} : memref<2x32xf32, #tpu.memory_space<vmem>>, vector<2x32xf32>,
    %c0_i32_20 = arith.constant 0 : i32
    %c16_i32 = arith.constant 16 : i32
    %17 = arith.addi %c0_i32_20, %c16_i32 : i32
    %c1_i32_21 = arith.constant 1 : i32
    scf.for %arg13 = %c0_i32_20 to %17 step %c1_i32_21  : i32 {
      %c1_i32_23 = arith.constant 1 : i32
      %18 = arith.muli %arg13, %c1_i32_23 : i32
      %c0_i32_24 = arith.constant 0 : i32
      %19 = arith.addi %c0_i32_24, %18 : i32
      %c15_i32_25 = arith.constant 15 : i32
      %20 = arith.subi %c15_i32_25, %19 : i32
      %21 = arith.index_cast %20 : i32 to index
      %c0_26 = arith.constant 0 : index
      %c0_27 = arith.constant 0 : index
      %22 = vector.load %arg4[%21, %c0_26, %c0_27] : memref<16x2x32xf32, #tpu.memory_space<vmem>>, vector<1x2x32xf32>
      %23 = vector.shape_cast %22 : vector<1x2x32xf32> to vector<2x32xf32>
      %24 = arith.index_cast %20 : i32 to index
      %c0_28 = arith.constant 0 : index
      %c0_29 = arith.constant 0 : index
      %25 = vector.load %arg5[%24, %c0_28, %c0_29] : memref<16x2x32xf32, #tpu.memory_space<vmem>>, vector<1x2x32xf32>
      %26 = vector.shape_cast %25 : vector<1x2x32xf32> to vector<2x32xf32>
      %c0_30 = arith.constant 0 : index
      %c0_31 = arith.constant 0 : index
      %27 = vector.load %arg10[%c0_30, %c0_31] : memref<2x32xf32, #tpu.memory_space<vmem>>, vector<2x32xf32>
      %c0_32 = arith.constant 0 : index
      %c0_33 = arith.constant 0 : index
      %28 = vector.load %arg11[%c0_32, %c0_33] : memref<2x32xf32, #tpu.memory_space<vmem>>, vector<2x32xf32>
      %c0_34 = arith.constant 0 : index
      %c0_35 = arith.constant 0 : index
      %29 = vector.load %arg12[%c0_34, %c0_35] : memref<2x32xf32, #tpu.memory_space<vmem>>, vector<2x32xf32>
      %30 = arith.index_cast %20 : i32 to index
      %c0_36 = arith.constant 0 : index
      %c0_37 = arith.constant 0 : index
      %31 = vector.load %arg7[%30, %c0_36, %c0_37] : memref<16x2x32xf32, #tpu.memory_space<vmem>>, vector<1x2x32xf32>
      %32 = vector.shape_cast %31 : vector<1x2x32xf32> to vector<2x32xf32>
      %33 = arith.index_cast %20 : i32 to index
      %c0_38 = arith.constant 0 : index
      %c0_39 = arith.constant 0 : index
      %34 = vector.load %arg8[%33, %c0_38, %c0_39] : memref<16x2x32xf32, #tpu.memory_space<vmem>>, vector<1x2x32xf32>
      %35 = vector.shape_cast %34 : vector<1x2x32xf32> to vector<2x32xf32>
      %36 = arith.index_cast %20 : i32 to index
      %c0_40 = arith.constant 0 : index
      %c0_41 = arith.constant 0 : index
      %37 = vector.load %arg9[%36, %c0_40, %c0_41] : memref<16x2x32xf32, #tpu.memory_space<vmem>>, vector<1x2x32xf32>
      %38 = vector.shape_cast %37 : vector<1x2x32xf32> to vector<2x32xf32>
      %39 = vector.broadcast %1 : vector<1x32xf32> to vector<2x32xf32>
      %40 = arith.addf %39, %23 : vector<2x32xf32>
      %41 = arith.maximumf %32, %27 : vector<2x32xf32>
      %42 = arith.maximumf %41, %40 : vector<2x32xf32>
      %43 = arith.subf %32, %42 : vector<2x32xf32>
      %44 = math.exp %43 : vector<2x32xf32>
      %45 = arith.subf %27, %42 : vector<2x32xf32>
      %46 = math.exp %45 : vector<2x32xf32>
      %47 = arith.subf %40, %42 : vector<2x32xf32>
      %48 = math.exp %47 : vector<2x32xf32>
      %49 = arith.mulf %44, %35 : vector<2x32xf32>
      %50 = arith.mulf %46, %28 : vector<2x32xf32>
      %51 = arith.addf %49, %50 : vector<2x32xf32>
      %52 = arith.mulf %48, %26 : vector<2x32xf32>
      %53 = arith.addf %51, %52 : vector<2x32xf32>
      %54 = arith.mulf %44, %38 : vector<2x32xf32>
      %55 = arith.mulf %46, %29 : vector<2x32xf32>
      %56 = arith.addf %54, %55 : vector<2x32xf32>
      %57 = arith.addf %56, %48 : vector<2x32xf32>
      %58 = arith.divf %53, %57 : vector<2x32xf32>
      %59 = arith.index_cast %20 : i32 to index
      %c0_42 = arith.constant 0 : index
      %c0_43 = arith.constant 0 : index
      %60 = vector.load %arg6[%59, %c0_42, %c0_43] : memref<16x2x32xf32, #tpu.memory_space<vmem>>, vector<1x2x32xf32>
      %61 = vector.shape_cast %60 : vector<1x2x32xf32> to vector<2x32xf32>
      %62 = vector.shape_cast %58 : vector<2x32xf32> to vector<1x2x32xf32>
      tpu.vector_store %arg6[%59, %c0_42, %c0_43], %62 {strides = array<i32>} : memref<16x2x32xf32, #tpu.memory_space<vmem>>, vector<1x2x32xf32>,
      %63 = vector.broadcast %0 : vector<1x32xf32> to vector<2x32xf32>
      %64 = arith.subf %27, %63 : vector<2x32xf32>
      %65 = arith.maximumf %64, %23 : vector<2x32xf32>
      %66 = arith.subf %64, %65 : vector<2x32xf32>
      %67 = math.exp %66 : vector<2x32xf32>
      %68 = arith.subf %23, %65 : vector<2x32xf32>
      %69 = math.exp %68 : vector<2x32xf32>
      %c0_44 = arith.constant 0 : index
      %c0_45 = arith.constant 0 : index
      %70 = vector.load %arg10[%c0_44, %c0_45] : memref<2x32xf32, #tpu.memory_space<vmem>>, vector<2x32xf32>
      tpu.vector_store %arg10[%c0_44, %c0_45], %65 {strides = array<i32>} : memref<2x32xf32, #tpu.memory_space<vmem>>, vector<2x32xf32>,
      %71 = arith.mulf %67, %28 : vector<2x32xf32>
      %72 = arith.mulf %69, %26 : vector<2x32xf32>
      %73 = arith.addf %71, %72 : vector<2x32xf32>
      %c0_46 = arith.constant 0 : index
      %c0_47 = arith.constant 0 : index
      %74 = vector.load %arg11[%c0_46, %c0_47] : memref<2x32xf32, #tpu.memory_space<vmem>>, vector<2x32xf32>
      tpu.vector_store %arg11[%c0_46, %c0_47], %73 {strides = array<i32>} : memref<2x32xf32, #tpu.memory_space<vmem>>, vector<2x32xf32>,
      %75 = arith.mulf %67, %29 : vector<2x32xf32>
      %76 = arith.addf %75, %69 : vector<2x32xf32>
      %c0_48 = arith.constant 0 : index
      %c0_49 = arith.constant 0 : index
      %77 = vector.load %arg12[%c0_48, %c0_49] : memref<2x32xf32, #tpu.memory_space<vmem>>, vector<2x32xf32>
      tpu.vector_store %arg12[%c0_48, %c0_49], %76 {strides = array<i32>} : memref<2x32xf32, #tpu.memory_space<vmem>>, vector<2x32xf32>,
    }
    %c16_i32_22 = arith.constant 16 : i32
    return
  }
  func.func @transform_0(%arg0: i32, %arg1: i32) -> (i32, i32) {
    %c0_i32 = arith.constant 0 : i32
    %c0_i32_0 = arith.constant 0 : i32
    return %c0_i32, %arg1 : i32, i32
  }
  func.func @transform_1(%arg0: i32, %arg1: i32) -> (i32, i32) {
    %c0_i32 = arith.constant 0 : i32
    %c0_i32_0 = arith.constant 0 : i32
    return %c0_i32, %arg1 : i32, i32
  }
  func.func @transform_2(%arg0: i32, %arg1: i32) -> (i32, i32, i32) {
    %c0_i32 = arith.constant 0 : i32
    %c0_i32_0 = arith.constant 0 : i32
    return %c0_i32, %arg0, %arg1 : i32, i32, i32
  }
  func.func @transform_3(%arg0: i32, %arg1: i32) -> (i32, i32, i32) {
    %c0_i32 = arith.constant 0 : i32
    %c0_i32_0 = arith.constant 0 : i32
    return %c0_i32, %arg0, %arg1 : i32, i32, i32
  }
  func.func @transform_4(%arg0: i32, %arg1: i32) -> (i32, i32, i32) {
    %c0_i32 = arith.constant 0 : i32
    %c0_i32_0 = arith.constant 0 : i32
    return %c0_i32, %arg0, %arg1 : i32, i32, i32
  }
}

module attributes {stable_mosaic.version = 11 : i64} {
  func.func @_ln_gate_matmul_kernel(%arg0: i32, %arg1: i32, %arg2: memref<32x32xf32, #tpu.memory_space<vmem>>, %arg3: memref<32x32xf32, #tpu.memory_space<vmem>>, %arg4: memref<1x32xf32, #tpu.memory_space<vmem>>, %arg5: memref<1x32xf32, #tpu.memory_space<vmem>>, %arg6: memref<32x32xbf16, #tpu.memory_space<vmem>>, %arg7: memref<32x32xf32, #tpu.memory_space<vmem>>) attributes {dimension_semantics = [#tpu.dimension_semantics<parallel>, #tpu.dimension_semantics<parallel>], iteration_bounds = array<i64: 1, 1>, scalar_prefetch = 0 : i64, scratch_operands = 0 : i64, tpu.core_type = #tpu.core_type<tc>, window_params = [{transform_indices = @transform_0, window_bounds = array<i64: 32, 32>}, {transform_indices = @transform_1, window_bounds = array<i64: 32, 32>}, {pipeline_mode = #tpu.pipeline_mode<synchronous>, transform_indices = @transform_2, window_bounds = array<i64: 1, 32>}, {pipeline_mode = #tpu.pipeline_mode<synchronous>, transform_indices = @transform_3, window_bounds = array<i64: 1, 32>}, {transform_indices = @transform_4, window_bounds = array<i64: 32, 32>}, {transform_indices = @transform_5, window_bounds = array<i64: 32, 32>}]} {
    %c0 = arith.constant 0 : index
    %c0_0 = arith.constant 0 : index
    %0 = vector.load %arg2[%c0, %c0_0] : memref<32x32xf32, #tpu.memory_space<vmem>>, vector<32x32xf32>
    %cst = arith.constant dense<0.000000e+00> : vector<32xf32>
    %1 = vector.multi_reduction <add>, %0, %cst [1] : vector<32x32xf32> to vector<32xf32>
    %2 = vector.shape_cast %1 : vector<32xf32> to vector<32x1xf32>
    %cst_1 = arith.constant 3.200000e+01 : f32
    %3 = vector.broadcast %cst_1 : f32 to vector<32x1xf32>
    %4 = arith.divf %2, %3 : vector<32x1xf32>
    %5 = vector.broadcast %4 : vector<32x1xf32> to vector<32x32xf32>
    %6 = arith.subf %0, %5 : vector<32x32xf32>
    %7 = arith.mulf %6, %6 : vector<32x32xf32>
    %cst_2 = arith.constant dense<0.000000e+00> : vector<32xf32>
    %8 = vector.multi_reduction <add>, %7, %cst_2 [1] : vector<32x32xf32> to vector<32xf32>
    %9 = vector.shape_cast %8 : vector<32xf32> to vector<32x1xf32>
    %cst_3 = arith.constant 3.200000e+01 : f32
    %10 = vector.broadcast %cst_3 : f32 to vector<32x1xf32>
    %11 = arith.divf %9, %10 : vector<32x1xf32>
    %12 = vector.broadcast %4 : vector<32x1xf32> to vector<32x32xf32>
    %13 = arith.subf %0, %12 : vector<32x32xf32>
    %cst_4 = arith.constant 9.99999974E-6 : f32
    %14 = vector.broadcast %cst_4 : f32 to vector<32x1xf32>
    %15 = arith.addf %11, %14 : vector<32x1xf32>
    %16 = math.rsqrt %15 : vector<32x1xf32>
    %17 = vector.broadcast %16 : vector<32x1xf32> to vector<32x32xf32>
    %18 = arith.mulf %13, %17 : vector<32x32xf32>
    %c0_5 = arith.constant 0 : index
    %c0_6 = arith.constant 0 : index
    %19 = vector.load %arg4[%c0_5, %c0_6] : memref<1x32xf32, #tpu.memory_space<vmem>>, vector<1x32xf32>
    %20 = vector.broadcast %19 : vector<1x32xf32> to vector<32x32xf32>
    %21 = arith.mulf %18, %20 : vector<32x32xf32>
    %c0_7 = arith.constant 0 : index
    %c0_8 = arith.constant 0 : index
    %22 = vector.load %arg5[%c0_7, %c0_8] : memref<1x32xf32, #tpu.memory_space<vmem>>, vector<1x32xf32>
    %23 = vector.broadcast %22 : vector<1x32xf32> to vector<32x32xf32>
    %24 = arith.addf %21, %23 : vector<32x32xf32>
    %c0_9 = arith.constant 0 : index
    %c0_10 = arith.constant 0 : index
    %25 = vector.load %arg3[%c0_9, %c0_10] : memref<32x32xf32, #tpu.memory_space<vmem>>, vector<32x32xf32>
    %26 = arith.negf %25 : vector<32x32xf32>
    %27 = math.exp %26 : vector<32x32xf32>
    %cst_11 = arith.constant 1.000000e+00 : f32
    %28 = vector.broadcast %cst_11 : f32 to vector<32x32xf32>
    %29 = arith.addf %28, %27 : vector<32x32xf32>
    %30 = arith.divf %28, %29 : vector<32x32xf32>
    %31 = arith.mulf %30, %24 : vector<32x32xf32>
    %32 = arith.truncf %31 : vector<32x32xf32> to vector<32x32xbf16>
    %c0_12 = arith.constant 0 : index
    %c0_13 = arith.constant 0 : index
    %33 = vector.load %arg6[%c0_12, %c0_13] : memref<32x32xbf16, #tpu.memory_space<vmem>>, vector<32x32xbf16>
    %cst_14 = arith.constant dense<0.000000e+00> : vector<32x32xf32>
    %34 = tpu.matmul %32, %33, %cst_14 {dimension_numbers = #tpu.dot_dimension_numbers<[1], [0], [0], [1], [0, 0, 1, 1], [], []>} : vector<32x32xbf16>, vector<32x32xbf16>, vector<32x32xf32> -> vector<32x32xf32>
    %c0_15 = arith.constant 0 : index
    %c0_16 = arith.constant 0 : index
    %35 = vector.load %arg7[%c0_15, %c0_16] : memref<32x32xf32, #tpu.memory_space<vmem>>, vector<32x32xf32>
    tpu.vector_store %arg7[%c0_15, %c0_16], %34 {strides = array<i32>} : memref<32x32xf32, #tpu.memory_space<vmem>>, vector<32x32xf32>,
    return
  }
  func.func @transform_0(%arg0: i32, %arg1: i32) -> (i32, i32) {
    %c0_i32 = arith.constant 0 : i32
    %c0_i32_0 = arith.constant 0 : i32
    return %arg0, %c0_i32 : i32, i32
  }
  func.func @transform_1(%arg0: i32, %arg1: i32) -> (i32, i32) {
    %c0_i32 = arith.constant 0 : i32
    %c0_i32_0 = arith.constant 0 : i32
    return %arg0, %c0_i32 : i32, i32
  }
  func.func @transform_2(%arg0: i32, %arg1: i32) -> (i32, i32) {
    %c0_i32 = arith.constant 0 : i32
    %c0_i32_0 = arith.constant 0 : i32
    %c0_i32_1 = arith.constant 0 : i32
    return %c0_i32, %c0_i32_0 : i32, i32
  }
  func.func @transform_3(%arg0: i32, %arg1: i32) -> (i32, i32) {
    %c0_i32 = arith.constant 0 : i32
    %c0_i32_0 = arith.constant 0 : i32
    %c0_i32_1 = arith.constant 0 : i32
    return %c0_i32, %c0_i32_0 : i32, i32
  }
  func.func @transform_4(%arg0: i32, %arg1: i32) -> (i32, i32) {
    %c0_i32 = arith.constant 0 : i32
    %c0_i32_0 = arith.constant 0 : i32
    return %c0_i32, %arg1 : i32, i32
  }
  func.func @transform_5(%arg0: i32, %arg1: i32) -> (i32, i32) {
    %c0_i32 = arith.constant 0 : i32
    return %arg0, %arg1 : i32, i32
  }
}

module attributes {stable_mosaic.version = 11 : i64} {
  func.func @_mix_matmul_kernel(%arg0: i32, %arg1: i32, %arg2: i32, %arg3: memref<32x32xf32, #tpu.memory_space<vmem>>, %arg4: memref<32x32xf32, #tpu.memory_space<vmem>>, %arg5: memref<1x32xf32, #tpu.memory_space<vmem>>, %arg6: memref<32x128xbf16, #tpu.memory_space<vmem>>, %arg7: memref<32x128xf32, #tpu.memory_space<vmem>>, %arg8: memref<32x128xf32, #tpu.memory_space<vmem>>) attributes {dimension_semantics = [#tpu.dimension_semantics<parallel>, #tpu.dimension_semantics<parallel>, #tpu.dimension_semantics<arbitrary>], iteration_bounds = array<i64: 1, 1, 1>, scalar_prefetch = 0 : i64, scratch_operands = 1 : i64, tpu.core_type = #tpu.core_type<tc>, window_params = [{transform_indices = @transform_0, window_bounds = array<i64: 32, 32>}, {transform_indices = @transform_1, window_bounds = array<i64: 32, 32>}, {transform_indices = @transform_2, window_bounds = array<i64: 1, 32>}, {transform_indices = @transform_3, window_bounds = array<i64: 32, 128>}, {transform_indices = @transform_4, window_bounds = array<i64: 32, 128>}]} {
    %c0_i32 = arith.constant 0 : i32
    %0 = arith.cmpi eq, %arg2, %c0_i32 : i32
    %1 = arith.extui %0 : i1 to i32
    %c0_i32_0 = arith.constant 0 : i32
    %2 = arith.cmpi ne, %1, %c0_i32_0 : i32
    scf.if %2 {
      %cst_15 = arith.constant 0.000000e+00 : f32
      %22 = vector.broadcast %cst_15 : f32 to vector<32x128xf32>
      %c0_16 = arith.constant 0 : index
      %c0_17 = arith.constant 0 : index
      %23 = vector.load %arg8[%c0_16, %c0_17] : memref<32x128xf32, #tpu.memory_space<vmem>>, vector<32x128xf32>
      tpu.vector_store %arg8[%c0_16, %c0_17], %22 {strides = array<i32>} : memref<32x128xf32, #tpu.memory_space<vmem>>, vector<32x128xf32>,
    } else {
    }
    %c0 = arith.constant 0 : index
    %c0_1 = arith.constant 0 : index
    %3 = vector.load %arg5[%c0, %c0_1] : memref<1x32xf32, #tpu.memory_space<vmem>>, vector<1x32xf32>
    %c0_2 = arith.constant 0 : index
    %c0_3 = arith.constant 0 : index
    %4 = vector.load %arg3[%c0_2, %c0_3] : memref<32x32xf32, #tpu.memory_space<vmem>>, vector<32x32xf32>
    %5 = vector.broadcast %3 : vector<1x32xf32> to vector<32x32xf32>
    %6 = arith.mulf %4, %5 : vector<32x32xf32>
    %c0_4 = arith.constant 0 : index
    %c0_5 = arith.constant 0 : index
    %7 = vector.load %arg4[%c0_4, %c0_5] : memref<32x32xf32, #tpu.memory_space<vmem>>, vector<32x32xf32>
    %cst = arith.constant 1.000000e+00 : f32
    %8 = vector.broadcast %cst : f32 to vector<1x32xf32>
    %9 = arith.subf %8, %3 : vector<1x32xf32>
    %10 = vector.broadcast %9 : vector<1x32xf32> to vector<32x32xf32>
    %11 = arith.mulf %7, %10 : vector<32x32xf32>
    %12 = arith.addf %6, %11 : vector<32x32xf32>
    %c0_6 = arith.constant 0 : index
    %c0_7 = arith.constant 0 : index
    %13 = vector.load %arg8[%c0_6, %c0_7] : memref<32x128xf32, #tpu.memory_space<vmem>>, vector<32x128xf32>
    %14 = arith.truncf %12 : vector<32x32xf32> to vector<32x32xbf16>
    %c0_8 = arith.constant 0 : index
    %c0_9 = arith.constant 0 : index
    %15 = vector.load %arg6[%c0_8, %c0_9] : memref<32x128xbf16, #tpu.memory_space<vmem>>, vector<32x128xbf16>
    %cst_10 = arith.constant dense<0.000000e+00> : vector<32x128xf32>
    %16 = tpu.matmul %14, %15, %cst_10 {dimension_numbers = #tpu.dot_dimension_numbers<[1], [0], [0], [1], [0, 0, 1, 1], [], []>} : vector<32x32xbf16>, vector<32x128xbf16>, vector<32x128xf32> -> vector<32x128xf32>
    %17 = arith.addf %13, %16 : vector<32x128xf32>
    %c0_11 = arith.constant 0 : index
    %c0_12 = arith.constant 0 : index
    %18 = vector.load %arg8[%c0_11, %c0_12] : memref<32x128xf32, #tpu.memory_space<vmem>>, vector<32x128xf32>
    tpu.vector_store %arg8[%c0_11, %c0_12], %17 {strides = array<i32>} : memref<32x128xf32, #tpu.memory_space<vmem>>, vector<32x128xf32>,
    %c0_i32_13 = arith.constant 0 : i32
    %19 = arith.cmpi eq, %arg2, %c0_i32_13 : i32
    %20 = arith.extui %19 : i1 to i32
    %c0_i32_14 = arith.constant 0 : i32
    %21 = arith.cmpi ne, %20, %c0_i32_14 : i32
    scf.if %21 {
      %c0_15 = arith.constant 0 : index
      %c0_16 = arith.constant 0 : index
      %22 = vector.load %arg8[%c0_15, %c0_16] : memref<32x128xf32, #tpu.memory_space<vmem>>, vector<32x128xf32>
      %c0_17 = arith.constant 0 : index
      %c0_18 = arith.constant 0 : index
      %23 = vector.load %arg7[%c0_17, %c0_18] : memref<32x128xf32, #tpu.memory_space<vmem>>, vector<32x128xf32>
      tpu.vector_store %arg7[%c0_17, %c0_18], %22 {strides = array<i32>} : memref<32x128xf32, #tpu.memory_space<vmem>>, vector<32x128xf32>,
    } else {
    }
    return
  }
  func.func @transform_0(%arg0: i32, %arg1: i32, %arg2: i32) -> (i32, i32) {
    %c0_i32 = arith.constant 0 : i32
    return %arg0, %arg2 : i32, i32
  }
  func.func @transform_1(%arg0: i32, %arg1: i32, %arg2: i32) -> (i32, i32) {
    %c0_i32 = arith.constant 0 : i32
    return %arg0, %arg2 : i32, i32
  }
  func.func @transform_2(%arg0: i32, %arg1: i32, %arg2: i32) -> (i32, i32) {
    %c0_i32 = arith.constant 0 : i32
    %c0_i32_0 = arith.constant 0 : i32
    return %c0_i32, %arg2 : i32, i32
  }
  func.func @transform_3(%arg0: i32, %arg1: i32, %arg2: i32) -> (i32, i32) {
    %c0_i32 = arith.constant 0 : i32
    return %arg2, %arg1 : i32, i32
  }
  func.func @transform_4(%arg0: i32, %arg1: i32, %arg2: i32) -> (i32, i32) {
    %c0_i32 = arith.constant 0 : i32
    return %arg0, %arg1 : i32, i32
  }
}

module attributes {stable_mosaic.version = 11 : i64} {
  func.func @_relusq_ln_matmul_gate_kernel(%arg0: i32, %arg1: i32, %arg2: memref<32x128xf32, #tpu.memory_space<vmem>>, %arg3: memref<1x128xf32, #tpu.memory_space<vmem>>, %arg4: memref<1x128xf32, #tpu.memory_space<vmem>>, %arg5: memref<128x32xbf16, #tpu.memory_space<vmem>>, %arg6: memref<32x32xf32, #tpu.memory_space<vmem>>, %arg7: memref<32x32xf32, #tpu.memory_space<vmem>>) attributes {dimension_semantics = [#tpu.dimension_semantics<parallel>, #tpu.dimension_semantics<parallel>], iteration_bounds = array<i64: 1, 1>, scalar_prefetch = 0 : i64, scratch_operands = 0 : i64, tpu.core_type = #tpu.core_type<tc>, window_params = [{transform_indices = @transform_0, window_bounds = array<i64: 32, 128>}, {pipeline_mode = #tpu.pipeline_mode<synchronous>, transform_indices = @transform_1, window_bounds = array<i64: 1, 128>}, {pipeline_mode = #tpu.pipeline_mode<synchronous>, transform_indices = @transform_2, window_bounds = array<i64: 1, 128>}, {transform_indices = @transform_3, window_bounds = array<i64: 128, 32>}, {transform_indices = @transform_4, window_bounds = array<i64: 32, 32>}, {transform_indices = @transform_5, window_bounds = array<i64: 32, 32>}]} {
    %c0 = arith.constant 0 : index
    %c0_0 = arith.constant 0 : index
    %0 = vector.load %arg2[%c0, %c0_0] : memref<32x128xf32, #tpu.memory_space<vmem>>, vector<32x128xf32>
    %cst = arith.constant 0.000000e+00 : f32
    %1 = vector.broadcast %cst : f32 to vector<32x128xf32>
    %2 = arith.maximumf %0, %1 : vector<32x128xf32>
    %3 = arith.mulf %2, %2 : vector<32x128xf32>
    %cst_1 = arith.constant dense<0.000000e+00> : vector<32xf32>
    %4 = vector.multi_reduction <add>, %3, %cst_1 [1] : vector<32x128xf32> to vector<32xf32>
    %5 = vector.shape_cast %4 : vector<32xf32> to vector<32x1xf32>
    %cst_2 = arith.constant 1.280000e+02 : f32
    %6 = vector.broadcast %cst_2 : f32 to vector<32x1xf32>
    %7 = arith.divf %5, %6 : vector<32x1xf32>
    %8 = vector.broadcast %7 : vector<32x1xf32> to vector<32x128xf32>
    %9 = arith.subf %3, %8 : vector<32x128xf32>
    %10 = arith.mulf %9, %9 : vector<32x128xf32>
    %cst_3 = arith.constant dense<0.000000e+00> : vector<32xf32>
    %11 = vector.multi_reduction <add>, %10, %cst_3 [1] : vector<32x128xf32> to vector<32xf32>
    %12 = vector.shape_cast %11 : vector<32xf32> to vector<32x1xf32>
    %cst_4 = arith.constant 1.280000e+02 : f32
    %13 = vector.broadcast %cst_4 : f32 to vector<32x1xf32>
    %14 = arith.divf %12, %13 : vector<32x1xf32>
    %15 = vector.broadcast %7 : vector<32x1xf32> to vector<32x128xf32>
    %16 = arith.subf %3, %15 : vector<32x128xf32>
    %cst_5 = arith.constant 9.99999974E-6 : f32
    %17 = vector.broadcast %cst_5 : f32 to vector<32x1xf32>
    %18 = arith.addf %14, %17 : vector<32x1xf32>
    %19 = math.rsqrt %18 : vector<32x1xf32>
    %20 = vector.broadcast %19 : vector<32x1xf32> to vector<32x128xf32>
    %21 = arith.mulf %16, %20 : vector<32x128xf32>
    %c0_6 = arith.constant 0 : index
    %c0_7 = arith.constant 0 : index
    %22 = vector.load %arg3[%c0_6, %c0_7] : memref<1x128xf32, #tpu.memory_space<vmem>>, vector<1x128xf32>
    %23 = vector.broadcast %22 : vector<1x128xf32> to vector<32x128xf32>
    %24 = arith.mulf %21, %23 : vector<32x128xf32>
    %c0_8 = arith.constant 0 : index
    %c0_9 = arith.constant 0 : index
    %25 = vector.load %arg4[%c0_8, %c0_9] : memref<1x128xf32, #tpu.memory_space<vmem>>, vector<1x128xf32>
    %26 = vector.broadcast %25 : vector<1x128xf32> to vector<32x128xf32>
    %27 = arith.addf %24, %26 : vector<32x128xf32>
    %28 = arith.truncf %27 : vector<32x128xf32> to vector<32x128xbf16>
    %c0_10 = arith.constant 0 : index
    %c0_11 = arith.constant 0 : index
    %29 = vector.load %arg5[%c0_10, %c0_11] : memref<128x32xbf16, #tpu.memory_space<vmem>>, vector<128x32xbf16>
    %cst_12 = arith.constant dense<0.000000e+00> : vector<32x32xf32>
    %30 = tpu.matmul %28, %29, %cst_12 {dimension_numbers = #tpu.dot_dimension_numbers<[1], [0], [0], [1], [0, 0, 1, 1], [], []>} : vector<32x128xbf16>, vector<128x32xbf16>, vector<32x32xf32> -> vector<32x32xf32>
    %c0_13 = arith.constant 0 : index
    %c0_14 = arith.constant 0 : index
    %31 = vector.load %arg6[%c0_13, %c0_14] : memref<32x32xf32, #tpu.memory_space<vmem>>, vector<32x32xf32>
    %32 = arith.negf %31 : vector<32x32xf32>
    %33 = math.exp %32 : vector<32x32xf32>
    %cst_15 = arith.constant 1.000000e+00 : f32
    %34 = vector.broadcast %cst_15 : f32 to vector<32x32xf32>
    %35 = arith.addf %34, %33 : vector<32x32xf32>
    %36 = arith.divf %34, %35 : vector<32x32xf32>
    %37 = arith.mulf %36, %30 : vector<32x32xf32>
    %c0_16 = arith.constant 0 : index
    %c0_17 = arith.constant 0 : index
    %38 = vector.load %arg7[%c0_16, %c0_17] : memref<32x32xf32, #tpu.memory_space<vmem>>, vector<32x32xf32>
    tpu.vector_store %arg7[%c0_16, %c0_17], %37 {strides = array<i32>} : memref<32x32xf32, #tpu.memory_space<vmem>>, vector<32x32xf32>,
    return
  }
  func.func @transform_0(%arg0: i32, %arg1: i32) -> (i32, i32) {
    %c0_i32 = arith.constant 0 : i32
    %c0_i32_0 = arith.constant 0 : i32
    return %arg0, %c0_i32 : i32, i32
  }
  func.func @transform_1(%arg0: i32, %arg1: i32) -> (i32, i32) {
    %c0_i32 = arith.constant 0 : i32
    %c0_i32_0 = arith.constant 0 : i32
    %c0_i32_1 = arith.constant 0 : i32
    return %c0_i32, %c0_i32_0 : i32, i32
  }
  func.func @transform_2(%arg0: i32, %arg1: i32) -> (i32, i32) {
    %c0_i32 = arith.constant 0 : i32
    %c0_i32_0 = arith.constant 0 : i32
    %c0_i32_1 = arith.constant 0 : i32
    return %c0_i32, %c0_i32_0 : i32, i32
  }
  func.func @transform_3(%arg0: i32, %arg1: i32) -> (i32, i32) {
    %c0_i32 = arith.constant 0 : i32
    %c0_i32_0 = arith.constant 0 : i32
    return %c0_i32, %arg1 : i32, i32
  }
  func.func @transform_4(%arg0: i32, %arg1: i32) -> (i32, i32) {
    %c0_i32 = arith.constant 0 : i32
    return %arg0, %arg1 : i32, i32
  }
  func.func @transform_5(%arg0: i32, %arg1: i32) -> (i32, i32) {
    %c0_i32 = arith.constant 0 : i32
    return %arg0, %arg1 : i32, i32
  }
}

module attributes {stable_mosaic.version = 11 : i64} {
  func.func @_mean_tokens_kernel(%arg0: i32, %arg1: memref<1x16x32xf32, #tpu.memory_space<vmem>>, %arg2: memref<1x1x32xf32, #tpu.memory_space<vmem>>) attributes {dimension_semantics = [#tpu.dimension_semantics<parallel>], iteration_bounds = array<i64: 2>, scalar_prefetch = 0 : i64, scratch_operands = 0 : i64, tpu.core_type = #tpu.core_type<tc>, window_params = [{transform_indices = @transform_0, window_bounds = array<i64: 1, 16, 32>}, {transform_indices = @transform_1, window_bounds = array<i64: 1, 1, 32>}]} {
    %c0 = arith.constant 0 : index
    %c0_0 = arith.constant 0 : index
    %c0_1 = arith.constant 0 : index
    %0 = vector.load %arg1[%c0, %c0_0, %c0_1] : memref<1x16x32xf32, #tpu.memory_space<vmem>>, vector<1x16x32xf32>
    %1 = vector.shape_cast %0 : vector<1x16x32xf32> to vector<16x32xf32>
    %cst = arith.constant dense<0.000000e+00> : vector<32xf32>
    %2 = vector.multi_reduction <add>, %1, %cst [0] : vector<16x32xf32> to vector<32xf32>
    %3 = vector.shape_cast %2 : vector<32xf32> to vector<1x32xf32>
    %cst_2 = arith.constant 1.600000e+01 : f32
    %4 = vector.broadcast %cst_2 : f32 to vector<1x32xf32>
    %5 = arith.divf %3, %4 : vector<1x32xf32>
    %c0_3 = arith.constant 0 : index
    %c0_4 = arith.constant 0 : index
    %c0_5 = arith.constant 0 : index
    %6 = vector.load %arg2[%c0_3, %c0_4, %c0_5] : memref<1x1x32xf32, #tpu.memory_space<vmem>>, vector<1x1x32xf32>
    %7 = vector.shape_cast %6 : vector<1x1x32xf32> to vector<1x32xf32>
    %8 = vector.shape_cast %5 : vector<1x32xf32> to vector<1x1x32xf32>
    tpu.vector_store %arg2[%c0_3, %c0_4, %c0_5], %8 {strides = array<i32>} : memref<1x1x32xf32, #tpu.memory_space<vmem>>, vector<1x1x32xf32>,
    return
  }
  func.func @transform_0(%arg0: i32) -> (i32, i32, i32) {
    %c0_i32 = arith.constant 0 : i32
    %c0_i32_0 = arith.constant 0 : i32
    %c0_i32_1 = arith.constant 0 : i32
    return %arg0, %c0_i32, %c0_i32_0 : i32, i32, i32
  }
  func.func @transform_1(%arg0: i32) -> (i32, i32, i32) {
    %c0_i32 = arith.constant 0 : i32
    %c0_i32_0 = arith.constant 0 : i32
    %c0_i32_1 = arith.constant 0 : i32
    return %arg0, %c0_i32, %c0_i32_0 : i32, i32, i32
  }
}

module attributes {stable_mosaic.version = 11 : i64} {
  func.func @_linear_bias_kernel(%arg0: i32, %arg1: i32, %arg2: i32, %arg3: memref<2x32xf32, #tpu.memory_space<vmem>>, %arg4: memref<32x128xbf16, #tpu.memory_space<vmem>>, %arg5: memref<1x128xf32, #tpu.memory_space<vmem>>, %arg6: memref<2x128xf32, #tpu.memory_space<vmem>>, %arg7: memref<2x128xf32, #tpu.memory_space<vmem>>) attributes {dimension_semantics = [#tpu.dimension_semantics<parallel>, #tpu.dimension_semantics<parallel>, #tpu.dimension_semantics<arbitrary>], iteration_bounds = array<i64: 1, 1, 1>, scalar_prefetch = 0 : i64, scratch_operands = 1 : i64, tpu.core_type = #tpu.core_type<tc>, window_params = [{transform_indices = @transform_0, window_bounds = array<i64: 2, 32>}, {transform_indices = @transform_1, window_bounds = array<i64: 32, 128>}, {transform_indices = @transform_2, window_bounds = array<i64: 1, 128>}, {transform_indices = @transform_3, window_bounds = array<i64: 2, 128>}]} {
    %c0_i32 = arith.constant 0 : i32
    %0 = arith.cmpi eq, %arg2, %c0_i32 : i32
    %1 = arith.extui %0 : i1 to i32
    %c0_i32_0 = arith.constant 0 : i32
    %2 = arith.cmpi ne, %1, %c0_i32_0 : i32
    scf.if %2 {
      %cst_10 = arith.constant 0.000000e+00 : f32
      %13 = vector.broadcast %cst_10 : f32 to vector<2x128xf32>
      %c0_11 = arith.constant 0 : index
      %c0_12 = arith.constant 0 : index
      %14 = vector.load %arg7[%c0_11, %c0_12] : memref<2x128xf32, #tpu.memory_space<vmem>>, vector<2x128xf32>
      tpu.vector_store %arg7[%c0_11, %c0_12], %13 {strides = array<i32>} : memref<2x128xf32, #tpu.memory_space<vmem>>, vector<2x128xf32>,
    } else {
    }
    %c0 = arith.constant 0 : index
    %c0_1 = arith.constant 0 : index
    %3 = vector.load %arg7[%c0, %c0_1] : memref<2x128xf32, #tpu.memory_space<vmem>>, vector<2x128xf32>
    %c0_2 = arith.constant 0 : index
    %c0_3 = arith.constant 0 : index
    %4 = vector.load %arg3[%c0_2, %c0_3] : memref<2x32xf32, #tpu.memory_space<vmem>>, vector<2x32xf32>
    %5 = arith.truncf %4 : vector<2x32xf32> to vector<2x32xbf16>
    %c0_4 = arith.constant 0 : index
    %c0_5 = arith.constant 0 : index
    %6 = vector.load %arg4[%c0_4, %c0_5] : memref<32x128xbf16, #tpu.memory_space<vmem>>, vector<32x128xbf16>
    %cst = arith.constant dense<0.000000e+00> : vector<2x128xf32>
    %7 = tpu.matmul %5, %6, %cst {dimension_numbers = #tpu.dot_dimension_numbers<[1], [0], [0], [1], [0, 0, 1, 1], [], []>} : vector<2x32xbf16>, vector<32x128xbf16>, vector<2x128xf32> -> vector<2x128xf32>
    %8 = arith.addf %3, %7 : vector<2x128xf32>
    %c0_6 = arith.constant 0 : index
    %c0_7 = arith.constant 0 : index
    %9 = vector.load %arg7[%c0_6, %c0_7] : memref<2x128xf32, #tpu.memory_space<vmem>>, vector<2x128xf32>
    tpu.vector_store %arg7[%c0_6, %c0_7], %8 {strides = array<i32>} : memref<2x128xf32, #tpu.memory_space<vmem>>, vector<2x128xf32>,
    %c0_i32_8 = arith.constant 0 : i32
    %10 = arith.cmpi eq, %arg2, %c0_i32_8 : i32
    %11 = arith.extui %10 : i1 to i32
    %c0_i32_9 = arith.constant 0 : i32
    %12 = arith.cmpi ne, %11, %c0_i32_9 : i32
    scf.if %12 {
      %c0_10 = arith.constant 0 : index
      %c0_11 = arith.constant 0 : index
      %13 = vector.load %arg7[%c0_10, %c0_11] : memref<2x128xf32, #tpu.memory_space<vmem>>, vector<2x128xf32>
      %c0_12 = arith.constant 0 : index
      %c0_13 = arith.constant 0 : index
      %14 = vector.load %arg5[%c0_12, %c0_13] : memref<1x128xf32, #tpu.memory_space<vmem>>, vector<1x128xf32>
      %15 = vector.broadcast %14 : vector<1x128xf32> to vector<2x128xf32>
      %16 = arith.addf %13, %15 : vector<2x128xf32>
      %c0_14 = arith.constant 0 : index
      %c0_15 = arith.constant 0 : index
      %17 = vector.load %arg6[%c0_14, %c0_15] : memref<2x128xf32, #tpu.memory_space<vmem>>, vector<2x128xf32>
      tpu.vector_store %arg6[%c0_14, %c0_15], %16 {strides = array<i32>} : memref<2x128xf32, #tpu.memory_space<vmem>>, vector<2x128xf32>,
    } else {
    }
    return
  }
  func.func @transform_0(%arg0: i32, %arg1: i32, %arg2: i32) -> (i32, i32) {
    %c0_i32 = arith.constant 0 : i32
    return %arg0, %arg2 : i32, i32
  }
  func.func @transform_1(%arg0: i32, %arg1: i32, %arg2: i32) -> (i32, i32) {
    %c0_i32 = arith.constant 0 : i32
    return %arg2, %arg1 : i32, i32
  }
  func.func @transform_2(%arg0: i32, %arg1: i32, %arg2: i32) -> (i32, i32) {
    %c0_i32 = arith.constant 0 : i32
    %c0_i32_0 = arith.constant 0 : i32
    return %c0_i32, %arg1 : i32, i32
  }
  func.func @transform_3(%arg0: i32, %arg1: i32, %arg2: i32) -> (i32, i32) {
    %c0_i32 = arith.constant 0 : i32
    return %arg0, %arg1 : i32, i32
  }
}

</mosaic_0001>

<llo_original>
// kernel: vrwkv_classification_forward.26
$region0: #{vrwkv_classification_forward.26}
  #allocation0 [shape = 'u32[]', space=smem, size = 0x4, offset = 0x4, fixed_abs, tag = 'smem constant byte address 0x4 - core index']
  #allocation1 [shape = 'u32[72,128]{1,0:T(1,128)}', space=vmem, size = 0x9000, scoped, tag = 'internal scratch']
  %s0 = inlined_call_operand.vmem [shape: f32[32,32], index: 0, kind: input, shape index: {}]
  %s1 = inlined_call_operand.vmem [shape: f32[1,32], index: 1, kind: input, shape index: {}]
  %s2 = inlined_call_operand.vmem [shape: f32[1,32], index: 2, kind: input, shape index: {}]
  %s3 = inlined_call_operand.vmem [shape: f32[32,32], index: 3, kind: output, shape index: {}]
  %s4 = sld [smem:[#allocation0]]
  $region22: #{vrwkv_classification_forward.26} parent=0
    _
  %s6 = ssub.s32 1, %s4
  %s7 = scalar_select 0, %s6, %s4
  // Predicated region
  $region2: #{vrwkv_classification_forward.26} parent=0 // pred_check
    _
  $region3: #{vrwkv_classification_forward.26} parent=0 // pred_check_branch
    %9 = sbr.rel (0) target = $region5
  $region4: #{vrwkv_classification_forward.26} parent=0 // pred_region
    _
  $region5: #{vrwkv_classification_forward.26} parent=0 // pred_fallthru
    _
  // Predicated region
  $region6: #{vrwkv_classification_forward.26} parent=0 // pred_check
    _
  $region7: #{vrwkv_classification_forward.26} parent=0 // pred_check_branch
    %11 = sbr.rel (0) target = $region9
  $region8: #{vrwkv_classification_forward.26} parent=0 // pred_region
    _
  $region9: #{vrwkv_classification_forward.26} parent=0 // pred_fallthru
    _
  // Predicated region
  $region10: #{vrwkv_classification_forward.26} parent=0 // pred_check
    _
  $region11: #{vrwkv_classification_forward.26} parent=0 // pred_check_branch
    %13 = sbr.rel (0) target = $region13
  $region12: #{vrwkv_classification_forward.26} parent=0 // pred_region
    _
  $region13: #{vrwkv_classification_forward.26} parent=0 // pred_fallthru
    _
  %v14 = vld [vmem:[%s0] sm:$0xff]
  %v15 = vld [vmem:[%s0 + $0x8] sm:$0xff]
  %v16 = vld [vmem:[%s0 + $0x10] sm:$0xff]
  %v17 = vld [vmem:[%s0 + $0x18] sm:$0xff]
  %vm18 = vcmask 261120
  %v19 = vsel %vm18, %v14, 0.0
  %20 = vadd.xlane.f32.xlu0 %v19
  %v21 = vpop.xlane.xlu0 %20
  %v22 = vsel %vm18, %v15, 0.0
  %23 = vadd.xlane.f32.xlu0 %v22
  %v24 = vpop.xlane.xlu0 %23
  %v25 = vsel %vm18, %v16, 0.0
  %26 = vadd.xlane.f32.xlu0 %v25
  %v27 = vpop.xlane.xlu0 %26
  %v28 = vsel %vm18, %v17, 0.0
  %29 = vadd.xlane.f32.xlu0 %v28
  %v30 = vpop.xlane.xlu0 %29
  %v31 = vrcp.pop 32.0
  %v32 = vmul.f32 32.0, %v31
  %v33 = vsub.f32 1.0, %v32
  %v34 = vmul.f32 %v31, %v33
  %v35 = vadd.f32 %v31, %v34
  %vm36 = vweird.f32 %v31
  %v37 = vsel %vm36, %v31, %v35
  %v38 = vmul.f32 %v21, %v37
  %v39 = vmul.f32 %v24, %v37
  %v40 = vmul.f32 %v27, %v37
  %v41 = vmul.f32 %v30, %v37
  %v42 = vsub.f32 %v14, %v38
  %v43 = vsub.f32 %v15, %v39
  %v44 = vsub.f32 %v16, %v40
  %v45 = vsub.f32 %v17, %v41
  %v46 = vmul.f32 %v42, %v42
  %v47 = vmul.f32 %v43, %v43
  %v48 = vmul.f32 %v44, %v44
  %v49 = vmul.f32 %v45, %v45
  %v50 = vsel %vm18, %v46, 0.0
  %51 = vadd.xlane.f32.xlu0 %v50
  %v52 = vpop.xlane.xlu0 %51
  %v53 = vsel %vm18, %v47, 0.0
  %54 = vadd.xlane.f32.xlu0 %v53
  %v55 = vpop.xlane.xlu0 %54
  %v56 = vsel %vm18, %v48, 0.0
  %57 = vadd.xlane.f32.xlu0 %v56
  %v58 = vpop.xlane.xlu0 %57
  %v59 = vsel %vm18, %v49, 0.0
  %60 = vadd.xlane.f32.xlu0 %v59
  %v61 = vpop.xlane.xlu0 %60
  %v62 = vmul.f32 %v52, %v37
  %v63 = vmul.f32 %v55, %v37
  %v64 = vmul.f32 %v58, %v37
  %v65 = vmul.f32 %v61, %v37
  %v66 = vadd.f32 %v62, 1e-05
  %v67 = vadd.f32 %v63, 1e-05
  %v68 = vadd.f32 %v64, 1e-05
  %v69 = vadd.f32 %v65, 1e-05
  %v70 = vrsqrt.pop %v66
  %v71 = vmul.f32 %v70, %v66
  %v72 = vmul.f32 %v71, %v70
  %v73 = vmul.f32 0.5, %v72
  %v74 = vsub.f32 1.5, %v73
  %v75 = vmul.f32 %v70, %v74
  %vm76 = vweird.f32 %v66
  %vm77 = vweird.f32 %v70
  %vm78 = vmor %vm76, %vm77
  %v79 = vsel %vm78, %v70, %v75
  %v80 = vrsqrt.pop %v67
  %v81 = vmul.f32 %v80, %v67
  %v82 = vmul.f32 %v81, %v80
  %v83 = vmul.f32 0.5, %v82
  %v84 = vsub.f32 1.5, %v83
  %v85 = vmul.f32 %v80, %v84
  %vm86 = vweird.f32 %v67
  %vm87 = vweird.f32 %v80
  %vm88 = vmor %vm86, %vm87
  %v89 = vsel %vm88, %v80, %v85
  %v90 = vrsqrt.pop %v68
  %v91 = vmul.f32 %v90, %v68
  %v92 = vmul.f32 %v91, %v90
  %v93 = vmul.f32 0.5, %v92
  %v94 = vsub.f32 1.5, %v93
  %v95 = vmul.f32 %v90, %v94
  %vm96 = vweird.f32 %v68
  %vm97 = vweird.f32 %v90
  %vm98 = vmor %vm96, %vm97
  %v99 = vsel %vm98, %v90, %v95
  %v100 = vrsqrt.pop %v69
  %v101 = vmul.f32 %v100, %v69
  %v102 = vmul.f32 %v101, %v100
  %v103 = vmul.f32 0.5, %v102
  %v104 = vsub.f32 1.5, %v103
  %v105 = vmul.f32 %v100, %v104
  %vm106 = vweird.f32 %v69
  %vm107 = vweird.f32 %v100
  %vm108 = vmor %vm106, %vm107
  %v109 = vsel %vm108, %v100, %v105
  %v110 = vmul.f32 %v42, %v79
  %v111 = vmul.f32 %v43, %v89
  %v112 = vmul.f32 %v44, %v99
  %v113 = vmul.f32 %v45, %v109
  %v114 = vld [vmem:[%s1] sm:$0x1]
  %v116 = vperm.slane %v114, 0
  %v118 = vmul.f32 %v110, %v116
  %v119 = vmul.f32 %v111, %v116
  %v120 = vmul.f32 %v112, %v116
  %v121 = vmul.f32 %v113, %v116
  %v122 = vld [vmem:[%s2] sm:$0x1]
  %v124 = vperm.slane %v122, 0
  %v126 = vadd.f32 %v118, %v124
  %v127 = vadd.f32 %v119, %v124
  %v128 = vadd.f32 %v120, %v124
  %v129 = vadd.f32 %v121, %v124
  %130 = vst.msk [vmem:[%s3] sm:$0xff] %vm18, %v126
  %131 = vst.msk [vmem:[%s3 + $0x8] sm:$0xff] %vm18, %v127
  %132 = vst.msk [vmem:[%s3 + $0x10] sm:$0xff] %vm18, %v128
  %133 = vst.msk [vmem:[%s3 + $0x18] sm:$0xff] %vm18, %v129
  // Predicated region
  $region14: #{vrwkv_classification_forward.26} parent=0 // pred_check
    _
  $region15: #{vrwkv_classification_forward.26} parent=0 // pred_check_branch
    %135 = sbr.rel (0) target = $region17
  $region16: #{vrwkv_classification_forward.26} parent=0 // pred_region
    _
  $region17: #{vrwkv_classification_forward.26} parent=0 // pred_fallthru
    _
  // Predicated region
  $region18: #{vrwkv_classification_forward.26} parent=0 // pred_check
    _
  $region19: #{vrwkv_classification_forward.26} parent=0 // pred_check_branch
    %137 = sbr.rel (0) target = $region21
  $region20: #{vrwkv_classification_forward.26} parent=0 // pred_region
    _
  $region21: #{vrwkv_classification_forward.26} parent=0 // pred_fallthru
    _

// kernel: vrwkv_classification_forward.25
$region0: #{vrwkv_classification_forward.25}
  #allocation0 [shape = 'u32[]', space=smem, size = 0x4, offset = 0x4, fixed_abs, tag = 'smem constant byte address 0x4 - core index']
  #allocation1 [shape = 'u32[72,128]{1,0:T(1,128)}', space=vmem, size = 0x9000, scoped, tag = 'internal scratch']
  #allocation2 [shape = 'f32[32,32]{1,0:T(8,128)}', space=vmem, size = 0x4000, scoped, tag = 'scratch operand']
  %s0 = inlined_call_operand.vmem [shape: f32[32,48], index: 0, kind: input, shape index: {}]
  %s1 = inlined_call_operand.vmem [shape: bf16[48,32], index: 1, kind: input, shape index: {}]
  %s2 = inlined_call_operand.vmem [shape: f32[1,32], index: 2, kind: input, shape index: {}]
  %s3 = inlined_call_operand.vmem [shape: f32[32,32], index: 3, kind: output, shape index: {}]
  %s4 = sld [smem:[#allocation0]]
  $region30: #{vrwkv_classification_forward.25} parent=0
    _
  %s6 = ssub.s32 1, %s4
  %s7 = scalar_select 0, %s6, %s4
  // Predicated region
  $region2: #{vrwkv_classification_forward.25} parent=0 // pred_check
    _
  $region3: #{vrwkv_classification_forward.25} parent=0 // pred_check_branch
    %9 = sbr.rel (0) target = $region5
  $region4: #{vrwkv_classification_forward.25} parent=0 // pred_region
    _
  $region5: #{vrwkv_classification_forward.25} parent=0 // pred_fallthru
    _
  // Predicated region
  $region6: #{vrwkv_classification_forward.25} parent=0 // pred_check
    _
  $region7: #{vrwkv_classification_forward.25} parent=0 // pred_check_branch
    %11 = sbr.rel (0) target = $region9
  $region8: #{vrwkv_classification_forward.25} parent=0 // pred_region
    _
  $region9: #{vrwkv_classification_forward.25} parent=0 // pred_fallthru
    _
  // Predicated region
  $region10: #{vrwkv_classification_forward.25} parent=0 // pred_check
    _
  $region11: #{vrwkv_classification_forward.25} parent=0 // pred_check_branch
    %13 = sbr.rel (0) target = $region13
  $region12: #{vrwkv_classification_forward.25} parent=0 // pred_region
    _
  $region13: #{vrwkv_classification_forward.25} parent=0 // pred_fallthru
    _
  %p15 = scmp.eq.s32.totalorder 0, 0
  // Predicated region
  $region14: #{vrwkv_classification_forward.25} parent=0 // pred_check
    %p16 = pneg %p15
  $region15: #{vrwkv_classification_forward.25} parent=0 // pred_check_branch
    %18 = sbr.rel (%p16) target = $region17
  $region16: #{vrwkv_classification_forward.25} parent=0 // pred_region
    %vm19 = vcmask 261120
    %20 = vst.msk [vmem:[#allocation2] sm:$0xff] %vm19, 0.0
    %21 = vst.msk [vmem:[#allocation2 + $0x8] sm:$0xff] %vm19, 0.0
    %22 = vst.msk [vmem:[#allocation2 + $0x10] sm:$0xff] %vm19, 0.0
    %23 = vst.msk [vmem:[#allocation2 + $0x18] sm:$0xff] %vm19, 0.0
  $region17: #{vrwkv_classification_forward.25} parent=0 // pred_fallthru
    _
  %v24 = vld [vmem:[#allocation2] sm:$0xff]
  %v25 = vld [vmem:[#allocation2 + $0x8] sm:$0xff]
  %v26 = vld [vmem:[#allocation2 + $0x10] sm:$0xff]
  %v27 = vld [vmem:[#allocation2 + $0x18] sm:$0xff]
  %v28 = vld [vmem:[%s0] sm:$0xff]
  %v29 = vld [vmem:[%s0 + $0x8] sm:$0xff]
  %v30 = vld [vmem:[%s0 + $0x10] sm:$0xff]
  %v31 = vld [vmem:[%s0 + $0x18] sm:$0xff]
  %v32 = vpack.c.bf16 %v29, %v28
  %v33 = vpack.c.bf16 %v31, %v30
  %v34 = vld [vmem:[%s1] sm:$0xf]
  %v35 = vld [vmem:[%s1 + $0x4] sm:$0xf]
  %v36 = vld [vmem:[%s1 + $0x8] sm:$0xf]
  %v37 = vld [vmem:[%s1 + $0xc] sm:$0xf]
  %v38 = vld [vmem:[%s1 + $0x10] sm:$0xf]
  %v39 = vld [vmem:[%s1 + $0x14] sm:$0xf]
  %v46 = vunpack.c.l.b16 %v34
  %v47 = vunpack.c.l.b16 %v35
  %v48 = vunpack.c.l.b16 %v36
  %v49 = vunpack.c.l.b16 %v37
  %v50 = vunpack.c.l.b16 %v38
  %v51 = vunpack.c.l.b16 %v39
  %v52 = vpack.c.b16 %v47, %v46
  %v53 = vpack.c.b16 %v49, %v48
  %v54 = vpack.c.b16 %v51, %v50
  %vm58 = vcmask 392192
  %v60 = vsel %vm58, %v32, 0
  %v63 = vsel %vm58, %v33, 0
  %65 = vmatpush.bf16.msra.mxu0 0
  %66 = vmatpush.bf16.msra.mxu0 0
  %67 = vmatpush.bf16.msra.mxu0 0
  %68 = vmatpush.bf16.msra.mxu0 0
  %69 = vmatpush.bf16.msra.mxu0 0
  %70 = vmatpush.bf16.msra.mxu0 %v54
  %71 = vmatpush.bf16.msra.mxu0 %v53
  %72 = vmatpush.bf16.msra.mxu0 %v52
  %73 = vmatmul.bf16.gmra.mxu0 %v60
  %v74 = vpop.f32.mrf.mxu0
  %v75 = vadd.f32 0.0, %v74
  %v76 = vpop.f32.mrf.mxu0
  %v77 = vadd.f32 0.0, %v76
  %78 = vmatmul.bf16.gmra.mxu0 %v63
  %v79 = vpop.f32.mrf.mxu0
  %v80 = vadd.f32 0.0, %v79
  %v81 = vpop.f32.mrf.mxu0
  %v82 = vadd.f32 0.0, %v81
  %83 = vdwg.mxu0
  %v84 = vadd.f32 %v24, %v75
  %v85 = vadd.f32 %v25, %v77
  %v86 = vadd.f32 %v26, %v80
  %v87 = vadd.f32 %v27, %v82
  %vm88 = vcmask 261120
  %89 = vst.msk [vmem:[#allocation2] sm:$0xff] %vm88, %v84
  %90 = vst.msk [vmem:[#allocation2 + $0x8] sm:$0xff] %vm88, %v85
  %91 = vst.msk [vmem:[#allocation2 + $0x10] sm:$0xff] %vm88, %v86
  %92 = vst.msk [vmem:[#allocation2 + $0x18] sm:$0xff] %vm88, %v87
  // Predicated region
  $region18: #{vrwkv_classification_forward.25} parent=0 // pred_check
    %p93 = pneg %p15
  $region19: #{vrwkv_classification_forward.25} parent=0 // pred_check_branch
    %95 = sbr.rel (%p93) target = $region21
  $region20: #{vrwkv_classification_forward.25} parent=0 // pred_region
    %v96 = vld [vmem:[#allocation2] sm:$0xff]
    %v97 = vld [vmem:[#allocation2 + $0x8] sm:$0xff]
    %v98 = vld [vmem:[#allocation2 + $0x10] sm:$0xff]
    %v99 = vld [vmem:[#allocation2 + $0x18] sm:$0xff]
    %v100 = vld [vmem:[%s2] sm:$0x1]
    %v102 = vperm.slane %v100, 0
    %v104 = vadd.f32 %v96, %v102
    %v105 = vadd.f32 %v97, %v102
    %v106 = vadd.f32 %v98, %v102
    %v107 = vadd.f32 %v99, %v102
    %108 = vst.msk [vmem:[%s3] sm:$0xff] %vm88, %v104
    %109 = vst.msk [vmem:[%s3 + $0x8] sm:$0xff] %vm88, %v105
    %110 = vst.msk [vmem:[%s3 + $0x10] sm:$0xff] %vm88, %v106
    %111 = vst.msk [vmem:[%s3 + $0x18] sm:$0xff] %vm88, %v107
  $region21: #{vrwkv_classification_forward.25} parent=0 // pred_fallthru
    _
  // Predicated region
  $region22: #{vrwkv_classification_forward.25} parent=0 // pred_check
    _
  $region23: #{vrwkv_classification_forward.25} parent=0 // pred_check_branch
    %113 = sbr.rel (0) target = $region25
  $region24: #{vrwkv_classification_forward.25} parent=0 // pred_region
    _
  $region25: #{vrwkv_classification_forward.25} parent=0 // pred_fallthru
    _
  // Predicated region
  $region26: #{vrwkv_classification_forward.25} parent=0 // pred_check
    _
  $region27: #{vrwkv_classification_forward.25} parent=0 // pred_check_branch
    %115 = sbr.rel (0) target = $region29
  $region28: #{vrwkv_classification_forward.25} parent=0 // pred_region
    _
  $region29: #{vrwkv_classification_forward.25} parent=0 // pred_fallthru
    _

// kernel: vrwkv_classification_forward.29
$region0: #{vrwkv_classification_forward.29}
  #allocation0 [shape = 'u32[]', space=smem, size = 0x4, offset = 0x4, fixed_abs, tag = 'smem constant byte address 0x4 - core index']
  #allocation1 [shape = 'u32[72,128]{1,0:T(1,128)}', space=vmem, size = 0x9000, scoped, tag = 'internal scratch']
  #allocation2 [shape = 'f32[32,32]{1,0:T(8,128)}', space=vmem, size = 0x4000, scoped, tag = 'scratch operand']
  %s0 = inlined_call_operand.vmem [shape: f32[32,32], index: 0, kind: input, shape index: {}]
  %s1 = inlined_call_operand.vmem [shape: f32[32,32], index: 1, kind: input, shape index: {}]
  %s2 = inlined_call_operand.vmem [shape: f32[1,32], index: 2, kind: input, shape index: {}]
  %s3 = inlined_call_operand.vmem [shape: bf16[32,32], index: 3, kind: input, shape index: {}]
  %s4 = inlined_call_operand.vmem [shape: f32[32,32], index: 4, kind: output, shape index: {}]
  %s5 = sld [smem:[#allocation0]]
  $region34: #{vrwkv_classification_forward.29} parent=0
    _
  %s7 = ssub.s32 1, %s5
  %s8 = scalar_select 0, %s7, %s5
  // Predicated region
  $region2: #{vrwkv_classification_forward.29} parent=0 // pred_check
    _
  $region3: #{vrwkv_classification_forward.29} parent=0 // pred_check_branch
    %10 = sbr.rel (0) target = $region5
  $region4: #{vrwkv_classification_forward.29} parent=0 // pred_region
    _
  $region5: #{vrwkv_classification_forward.29} parent=0 // pred_fallthru
    _
  // Predicated region
  $region6: #{vrwkv_classification_forward.29} parent=0 // pred_check
    _
  $region7: #{vrwkv_classification_forward.29} parent=0 // pred_check_branch
    %12 = sbr.rel (0) target = $region9
  $region8: #{vrwkv_classification_forward.29} parent=0 // pred_region
    _
  $region9: #{vrwkv_classification_forward.29} parent=0 // pred_fallthru
    _
  // Predicated region
  $region10: #{vrwkv_classification_forward.29} parent=0 // pred_check
    _
  $region11: #{vrwkv_classification_forward.29} parent=0 // pred_check_branch
    %14 = sbr.rel (0) target = $region13
  $region12: #{vrwkv_classification_forward.29} parent=0 // pred_region
    _
  $region13: #{vrwkv_classification_forward.29} parent=0 // pred_fallthru
    _
  // Predicated region
  $region14: #{vrwkv_classification_forward.29} parent=0 // pred_check
    _
  $region15: #{vrwkv_classification_forward.29} parent=0 // pred_check_branch
    %16 = sbr.rel (0) target = $region17
  $region16: #{vrwkv_classification_forward.29} parent=0 // pred_region
    _
  $region17: #{vrwkv_classification_forward.29} parent=0 // pred_fallthru
    _
  %p18 = scmp.eq.s32.totalorder 0, 0
  // Predicated region
  $region18: #{vrwkv_classification_forward.29} parent=0 // pred_check
    %p19 = pneg %p18
  $region19: #{vrwkv_classification_forward.29} parent=0 // pred_check_branch
    %21 = sbr.rel (%p19) target = $region21
  $region20: #{vrwkv_classification_forward.29} parent=0 // pred_region
    %vm22 = vcmask 261120
    %23 = vst.msk [vmem:[#allocation2] sm:$0xff] %vm22, 0.0
    %24 = vst.msk [vmem:[#allocation2 + $0x8] sm:$0xff] %vm22, 0.0
    %25 = vst.msk [vmem:[#allocation2 + $0x10] sm:$0xff] %vm22, 0.0
    %26 = vst.msk [vmem:[#allocation2 + $0x18] sm:$0xff] %vm22, 0.0
  $region21: #{vrwkv_classification_forward.29} parent=0 // pred_fallthru
    _
  %v27 = vld [vmem:[%s2] sm:$0x1]
  %v28 = vld [vmem:[%s0] sm:$0xff]
  %v29 = vld [vmem:[%s0 + $0x8] sm:$0xff]
  %v30 = vld [vmem:[%s0 + $0x10] sm:$0xff]
  %v31 = vld [vmem:[%s0 + $0x18] sm:$0xff]
  %v33 = vperm.slane %v27, 0
  %v35 = vmul.f32 %v28, %v33
  %v36 = vmul.f32 %v29, %v33
  %v37 = vmul.f32 %v30, %v33
  %v38 = vmul.f32 %v31, %v33
  %v39 = vld [vmem:[%s1] sm:$0xff]
  %v40 = vld [vmem:[%s1 + $0x8] sm:$0xff]
  %v41 = vld [vmem:[%s1 + $0x10] sm:$0xff]
  %v42 = vld [vmem:[%s1 + $0x18] sm:$0xff]
  %v43 = vsub.f32 1.0, %v27
  %v45 = vperm.slane %v43, 0
  %v47 = vmul.f32 %v39, %v45
  %v48 = vmul.f32 %v40, %v45
  %v49 = vmul.f32 %v41, %v45
  %v50 = vmul.f32 %v42, %v45
  %v51 = vadd.f32 %v35, %v47
  %v52 = vadd.f32 %v36, %v48
  %v53 = vadd.f32 %v37, %v49
  %v54 = vadd.f32 %v38, %v50
  %v55 = vld [vmem:[#allocation2] sm:$0xff]
  %v56 = vld [vmem:[#allocation2 + $0x8] sm:$0xff]
  %v57 = vld [vmem:[#allocation2 + $0x10] sm:$0xff]
  %v58 = vld [vmem:[#allocation2 + $0x18] sm:$0xff]
  %v59 = vpack.c.bf16 %v52, %v51
  %v60 = vpack.c.bf16 %v54, %v53
  %v61 = vld [vmem:[%s3] sm:$0xf]
  %v62 = vld [vmem:[%s3 + $0x4] sm:$0xf]
  %v63 = vld [vmem:[%s3 + $0x8] sm:$0xf]
  %v64 = vld [vmem:[%s3 + $0xc] sm:$0xf]
  %v69 = vunpack.c.l.b16 %v61
  %v70 = vunpack.c.l.b16 %v62
  %v71 = vunpack.c.l.b16 %v63
  %v72 = vunpack.c.l.b16 %v64
  %v73 = vpack.c.b16 %v70, %v69
  %v74 = vpack.c.b16 %v72, %v71
  %vm77 = vcmask 261120
  %v79 = vsel %vm77, %v59, 0
  %v82 = vsel %vm77, %v60, 0
  %84 = vmatpush.bf16.msra.mxu0 0
  %85 = vmatpush.bf16.msra.mxu0 0
  %86 = vmatpush.bf16.msra.mxu0 0
  %87 = vmatpush.bf16.msra.mxu0 0
  %88 = vmatpush.bf16.msra.mxu0 0
  %89 = vmatpush.bf16.msra.mxu0 0
  %90 = vmatpush.bf16.msra.mxu0 %v74
  %91 = vmatpush.bf16.msra.mxu0 %v73
  %92 = vmatmul.bf16.gmra.mxu0 %v79
  %v93 = vpop.f32.mrf.mxu0
  %v94 = vadd.f32 0.0, %v93
  %v95 = vpop.f32.mrf.mxu0
  %v96 = vadd.f32 0.0, %v95
  %97 = vmatmul.bf16.gmra.mxu0 %v82
  %v98 = vpop.f32.mrf.mxu0
  %v99 = vadd.f32 0.0, %v98
  %v100 = vpop.f32.mrf.mxu0
  %v101 = vadd.f32 0.0, %v100
  %102 = vdwg.mxu0
  %v103 = vadd.f32 %v55, %v94
  %v104 = vadd.f32 %v56, %v96
  %v105 = vadd.f32 %v57, %v99
  %v106 = vadd.f32 %v58, %v101
  %107 = vst.msk [vmem:[#allocation2] sm:$0xff] %vm77, %v103
  %108 = vst.msk [vmem:[#allocation2 + $0x8] sm:$0xff] %vm77, %v104
  %109 = vst.msk [vmem:[#allocation2 + $0x10] sm:$0xff] %vm77, %v105
  %110 = vst.msk [vmem:[#allocation2 + $0x18] sm:$0xff] %vm77, %v106
  // Predicated region
  $region22: #{vrwkv_classification_forward.29} parent=0 // pred_check
    %p111 = pneg %p18
  $region23: #{vrwkv_classification_forward.29} parent=0 // pred_check_branch
    %113 = sbr.rel (%p111) target = $region25
  $region24: #{vrwkv_classification_forward.29} parent=0 // pred_region
    %v114 = vld [vmem:[#allocation2] sm:$0xff]
    %v115 = vld [vmem:[#allocation2 + $0x8] sm:$0xff]
    %v116 = vld [vmem:[#allocation2 + $0x10] sm:$0xff]
    %v117 = vld [vmem:[#allocation2 + $0x18] sm:$0xff]
    %118 = vst.msk [vmem:[%s4] sm:$0xff] %vm77, %v114
    %119 = vst.msk [vmem:[%s4 + $0x8] sm:$0xff] %vm77, %v115
    %120 = vst.msk [vmem:[%s4 + $0x10] sm:$0xff] %vm77, %v116
    %121 = vst.msk [vmem:[%s4 + $0x18] sm:$0xff] %vm77, %v117
  $region25: #{vrwkv_classification_forward.29} parent=0 // pred_fallthru
    _
  // Predicated region
  $region26: #{vrwkv_classification_forward.29} parent=0 // pred_check
    _
  $region27: #{vrwkv_classification_forward.29} parent=0 // pred_check_branch
    %123 = sbr.rel (0) target = $region29
  $region28: #{vrwkv_classification_forward.29} parent=0 // pred_region
    _
  $region29: #{vrwkv_classification_forward.29} parent=0 // pred_fallthru
    _
  // Predicated region
  $region30: #{vrwkv_classification_forward.29} parent=0 // pred_check
    _
  $region31: #{vrwkv_classification_forward.29} parent=0 // pred_check_branch
    %125 = sbr.rel (0) target = $region33
  $region32: #{vrwkv_classification_forward.29} parent=0 // pred_region
    _
  $region33: #{vrwkv_classification_forward.29} parent=0 // pred_fallthru
    _

// kernel: vrwkv_classification_forward.31
$region0: #{vrwkv_classification_forward.31}
  #allocation0 [shape = 'u32[]', space=smem, size = 0x4, offset = 0x4, fixed_abs, tag = 'smem constant byte address 0x4 - core index']
  #allocation1 [shape = 'u32[72,128]{1,0:T(1,128)}', space=vmem, size = 0x9000, scoped, tag = 'internal scratch']
  #allocation2 [shape = 'f32[16,2,32]{2,1,0:T(2,128)}', space=vmem, size = 0x4000, scoped, tag = 'scratch operand']
  #allocation3 [shape = 'f32[16,2,32]{2,1,0:T(2,128)}', space=vmem, size = 0x4000, scoped, tag = 'scratch operand']
  #allocation4 [shape = 'f32[16,2,32]{2,1,0:T(2,128)}', space=vmem, size = 0x4000, scoped, tag = 'scratch operand']
  #allocation5 [shape = 'f32[2,32]{1,0:T(2,128)}', space=vmem, size = 0x400, scoped, tag = 'scratch operand']
  #allocation6 [shape = 'f32[2,32]{1,0:T(2,128)}', space=vmem, size = 0x400, scoped, tag = 'scratch operand']
  #allocation7 [shape = 'f32[2,32]{1,0:T(2,128)}', space=vmem, size = 0x400, scoped, tag = 'scratch operand']
  %s0 = inlined_call_operand.vmem [shape: f32[1,32], index: 0, kind: input, shape index: {}]
  %s1 = inlined_call_operand.vmem [shape: f32[1,32], index: 1, kind: input, shape index: {}]
  %s2 = inlined_call_operand.vmem [shape: f32[16,2,32], index: 2, kind: input, shape index: {}]
  %s3 = inlined_call_operand.vmem [shape: f32[16,2,32], index: 3, kind: input, shape index: {}]
  %s4 = inlined_call_operand.vmem [shape: f32[16,2,32], index: 4, kind: output, shape index: {}]
  %s5 = sld [smem:[#allocation0]]
  $region40: #{vrwkv_classification_forward.31} parent=0
    _
  %s7 = ssub.s32 1, %s5
  %s8 = scalar_select 0, %s7, %s5
  // Predicated region
  $region2: #{vrwkv_classification_forward.31} parent=0 // pred_check
    _
  $region3: #{vrwkv_classification_forward.31} parent=0 // pred_check_branch
    %10 = sbr.rel (0) target = $region5
  $region4: #{vrwkv_classification_forward.31} parent=0 // pred_region
    _
  $region5: #{vrwkv_classification_forward.31} parent=0 // pred_fallthru
    _
  // Predicated region
  $region6: #{vrwkv_classification_forward.31} parent=0 // pred_check
    _
  $region7: #{vrwkv_classification_forward.31} parent=0 // pred_check_branch
    %12 = sbr.rel (0) target = $region9
  $region8: #{vrwkv_classification_forward.31} parent=0 // pred_region
    _
  $region9: #{vrwkv_classification_forward.31} parent=0 // pred_fallthru
    _
  // Predicated region
  $region10: #{vrwkv_classification_forward.31} parent=0 // pred_check
    _
  $region11: #{vrwkv_classification_forward.31} parent=0 // pred_check_branch
    %14 = sbr.rel (0) target = $region13
  $region12: #{vrwkv_classification_forward.31} parent=0 // pred_region
    _
  $region13: #{vrwkv_classification_forward.31} parent=0 // pred_fallthru
    _
  // Predicated region
  $region14: #{vrwkv_classification_forward.31} parent=0 // pred_check
    _
  $region15: #{vrwkv_classification_forward.31} parent=0 // pred_check_branch
    %16 = sbr.rel (0) target = $region17
  $region16: #{vrwkv_classification_forward.31} parent=0 // pred_region
    _
  $region17: #{vrwkv_classification_forward.31} parent=0 // pred_fallthru
    _
  %v17 = vld [vmem:[%s0] sm:$0x1]
  %v18 = vld [vmem:[%s1] sm:$0x1]
  %vm19 = vcmask 254976
  %20 = vst.msk [vmem:[#allocation2] sm:$0x3] %vm19, -1e+30
  %21 = vst.msk [vmem:[#allocation3] sm:$0x3] %vm19, 0.0
  %22 = vst.msk [vmem:[#allocation4] sm:$0x3] %vm19, 0.0
  loop: start=0, step=1, limit=15
  $region18: #{vrwkv_classification_forward.31} parent=0 // loop_pre_header
    _
  $region19: #{vrwkv_classification_forward.31} parent=0 // loop_header
    %s24 = sphi 0, %s28
    %p25 = scmp.ge.s32.totalorder %s24, 15
  $region20: #{vrwkv_classification_forward.31} parent=0 // loop_header_branch
    %27 = sbr.rel (%p25) target = $region24
  $region21: #{vrwkv_classification_forward.31} parent=0 // loop_body
    %s29 = smul.u32 %s24, 2
    %s30 = scalar_lea.vmem [#allocation2], %s29
    %v31 = vld [vmem:[%s30] sm:$0x3]
    %s32 = scalar_lea.vmem [#allocation3], %s29
    %v33 = vld [vmem:[%s32] sm:$0x3]
    %s34 = scalar_lea.vmem [#allocation4], %s29
    %v35 = vld [vmem:[%s34] sm:$0x3]
    %s36 = scalar_lea.vmem %s2, %s29
    %v37 = vld [vmem:[%s36] sm:$0x3]
    %s38 = scalar_lea.vmem %s3, %s29
    %v39 = vld [vmem:[%s38] sm:$0x3]
    %v41 = vperm.slane %v17, 0
    %v43 = vsub.f32 %v31, %v41
    %v44 = vmax.f32 %v43, %v37
    %v45 = vsub.f32 %v43, %v44
    %v46 = vmul.f32 %v45, 1.442695
    %v47 = vpow.pop %v46
    %v48 = vsub.f32 %v37, %v44
    %v49 = vmul.f32 %v48, 1.442695
    %v50 = vpow.pop %v49
    %s51 = sadd.s32 %s24, 1
    %s52 = smul.u32 %s51, 2
    %s53 = scalar_lea.vmem [#allocation2], %s52
    %54 = vst.msk [vmem:[%s53] sm:$0x3] %vm19, %v44
    %v55 = vmul.f32 %v47, %v33
    %v56 = vmul.f32 %v50, %v39
    %v57 = vadd.f32 %v55, %v56
    %s58 = scalar_lea.vmem [#allocation3], %s52
    %59 = vst.msk [vmem:[%s58] sm:$0x3] %vm19, %v57
    %v60 = vmul.f32 %v47, %v35
    %v61 = vadd.f32 %v60, %v50
    %s62 = scalar_lea.vmem [#allocation4], %s52
    %63 = vst.msk [vmem:[%s62] sm:$0x3] %vm19, %v61
  $region22: #{vrwkv_classification_forward.31} parent=0 // loop_footer
    %s28 = sadd.s32 1, %s24
  $region23: #{vrwkv_classification_forward.31} parent=0 // loop_footer_branch
    %23 = sbr.rel target = $region19
  $region24: #{vrwkv_classification_forward.31} parent=0 // loop_exit
    _
  %64 = vst.msk [vmem:[#allocation5] sm:$0x3] %vm19, -1e+30
  %65 = vst.msk [vmem:[#allocation6] sm:$0x3] %vm19, 0.0
  %66 = vst.msk [vmem:[#allocation7] sm:$0x3] %vm19, 0.0
  loop: start=0, step=1, limit=16
  $region25: #{vrwkv_classification_forward.31} parent=0 // loop_pre_header
    _
  $region26: #{vrwkv_classification_forward.31} parent=0 // loop_header
    %s68 = sphi 0, %s72
    %p69 = scmp.ge.s32.totalorder %s68, 16
  $region27: #{vrwkv_classification_forward.31} parent=0 // loop_header_branch
    %71 = sbr.rel (%p69) target = $region31
  $region28: #{vrwkv_classification_forward.31} parent=0 // loop_body
    %s73 = ssub.s32 15, %s68
    %s74 = smul.u32 %s73, 2
    %s75 = scalar_lea.vmem %s2, %s74
    %v76 = vld [vmem:[%s75] sm:$0x3]
    %s77 = scalar_lea.vmem %s3, %s74
    %v78 = vld [vmem:[%s77] sm:$0x3]
    %v79 = vld [vmem:[#allocation5] sm:$0x3]
    %v80 = vld [vmem:[#allocation6] sm:$0x3]
    %v81 = vld [vmem:[#allocation7] sm:$0x3]
    %s82 = scalar_lea.vmem [#allocation2], %s74
    %v83 = vld [vmem:[%s82] sm:$0x3]
    %s84 = scalar_lea.vmem [#allocation3], %s74
    %v85 = vld [vmem:[%s84] sm:$0x3]
    %s86 = scalar_lea.vmem [#allocation4], %s74
    %v87 = vld [vmem:[%s86] sm:$0x3]
    %v89 = vperm.slane %v18, 0
    %v91 = vadd.f32 %v89, %v76
    %v92 = vmax.f32 %v83, %v79
    %v93 = vmax.f32 %v92, %v91
    %v94 = vsub.f32 %v83, %v93
    %v95 = vmul.f32 %v94, 1.442695
    %v96 = vpow.pop %v95
    %v97 = vsub.f32 %v79, %v93
    %v98 = vmul.f32 %v97, 1.442695
    %v99 = vpow.pop %v98
    %v100 = vsub.f32 %v91, %v93
    %v101 = vmul.f32 %v100, 1.442695
    %v102 = vpow.pop %v101
    %v103 = vmul.f32 %v96, %v85
    %v104 = vmul.f32 %v99, %v80
    %v105 = vadd.f32 %v103, %v104
    %v106 = vmul.f32 %v102, %v78
    %v107 = vadd.f32 %v105, %v106
    %v108 = vmul.f32 %v96, %v87
    %v109 = vmul.f32 %v99, %v81
    %v110 = vadd.f32 %v108, %v109
    %v111 = vadd.f32 %v110, %v102
    %v112 = vrcp.pop %v111
    %v113 = vmul.f32 %v111, %v112
    %v114 = vsub.f32 1.0, %v113
    %v115 = vmul.f32 %v112, %v114
    %v116 = vadd.f32 %v112, %v115
    %vm117 = vweird.f32 %v111
    %vm118 = vweird.f32 %v112
    %vm119 = vmor %vm117, %vm118
    %v120 = vsel %vm119, %v112, %v116
    %v121 = vand.u32 2147483647, %v111
    %vm122 = vcmp.eq.f32.partialorder %v121, 8.507059e+37
    %v123 = vand.u32 %v111, 2147483648
    %v124 = vor.u32 1.1754944e-38, %v123
    %v125 = vsel %vm122, %v124, %v120
    %v126 = vmul.f32 %v107, %v125
    %s127 = scalar_lea.vmem %s4, %s74
    %128 = vst.msk [vmem:[%s127] sm:$0x3] %vm19, %v126
    %v130 = vperm.slane %v17, 0
    %v132 = vsub.f32 %v79, %v130
    %v133 = vmax.f32 %v132, %v76
    %v134 = vsub.f32 %v132, %v133
    %v135 = vmul.f32 %v134, 1.442695
    %v136 = vpow.pop %v135
    %v137 = vsub.f32 %v76, %v133
    %v138 = vmul.f32 %v137, 1.442695
    %v139 = vpow.pop %v138
    %140 = vst.msk [vmem:[#allocation5] sm:$0x3] %vm19, %v133
    %v141 = vmul.f32 %v136, %v80
    %v142 = vmul.f32 %v139, %v78
    %v143 = vadd.f32 %v141, %v142
    %144 = vst.msk [vmem:[#allocation6] sm:$0x3] %vm19, %v143
    %v145 = vmul.f32 %v136, %v81
    %v146 = vadd.f32 %v145, %v139
    %147 = vst.msk [vmem:[#allocation7] sm:$0x3] %vm19, %v146
  $region29: #{vrwkv_classification_forward.31} parent=0 // loop_footer
    %s72 = sadd.s32 1, %s68
  $region30: #{vrwkv_classification_forward.31} parent=0 // loop_footer_branch
    %67 = sbr.rel target = $region26
  $region31: #{vrwkv_classification_forward.31} parent=0 // loop_exit
    _
  // Predicated region
  $region32: #{vrwkv_classification_forward.31} parent=0 // pred_check
    _
  $region33: #{vrwkv_classification_forward.31} parent=0 // pred_check_branch
    %149 = sbr.rel (0) target = $region35
  $region34: #{vrwkv_classification_forward.31} parent=0 // pred_region
    _
  $region35: #{vrwkv_classification_forward.31} parent=0 // pred_fallthru
    _
  // Predicated region
  $region36: #{vrwkv_classification_forward.31} parent=0 // pred_check
    _
  $region37: #{vrwkv_classification_forward.31} parent=0 // pred_check_branch
    %151 = sbr.rel (0) target = $region39
  $region38: #{vrwkv_classification_forward.31} parent=0 // pred_region
    _
  $region39: #{vrwkv_classification_forward.31} parent=0 // pred_fallthru
    _

// kernel: vrwkv_classification_forward.34
$region0: #{vrwkv_classification_forward.34}
  #allocation0 [shape = 'u32[]', space=smem, size = 0x4, offset = 0x4, fixed_abs, tag = 'smem constant byte address 0x4 - core index']
  #allocation1 [shape = 'u32[72,128]{1,0:T(1,128)}', space=vmem, size = 0x9000, scoped, tag = 'internal scratch']
  #allocation2 [shape = 'f32[32,128]{1,0:T(8,128)}', space=vmem, size = 0x4000, scoped, tag = 'scratch operand']
  %s0 = inlined_call_operand.vmem [shape: f32[32,32], index: 0, kind: input, shape index: {}]
  %s1 = inlined_call_operand.vmem [shape: f32[32,32], index: 1, kind: input, shape index: {}]
  %s2 = inlined_call_operand.vmem [shape: f32[1,32], index: 2, kind: input, shape index: {}]
  %s3 = inlined_call_operand.vmem [shape: bf16[32,128], index: 3, kind: input, shape index: {}]
  %s4 = inlined_call_operand.vmem [shape: f32[32,128], index: 4, kind: output, shape index: {}]
  %s5 = sld [smem:[#allocation0]]
  $region34: #{vrwkv_classification_forward.34} parent=0
    _
  %s7 = ssub.s32 1, %s5
  %s8 = scalar_select 0, %s7, %s5
  // Predicated region
  $region2: #{vrwkv_classification_forward.34} parent=0 // pred_check
    _
  $region3: #{vrwkv_classification_forward.34} parent=0 // pred_check_branch
    %10 = sbr.rel (0) target = $region5
  $region4: #{vrwkv_classification_forward.34} parent=0 // pred_region
    _
  $region5: #{vrwkv_classification_forward.34} parent=0 // pred_fallthru
    _
  // Predicated region
  $region6: #{vrwkv_classification_forward.34} parent=0 // pred_check
    _
  $region7: #{vrwkv_classification_forward.34} parent=0 // pred_check_branch
    %12 = sbr.rel (0) target = $region9
  $region8: #{vrwkv_classification_forward.34} parent=0 // pred_region
    _
  $region9: #{vrwkv_classification_forward.34} parent=0 // pred_fallthru
    _
  // Predicated region
  $region10: #{vrwkv_classification_forward.34} parent=0 // pred_check
    _
  $region11: #{vrwkv_classification_forward.34} parent=0 // pred_check_branch
    %14 = sbr.rel (0) target = $region13
  $region12: #{vrwkv_classification_forward.34} parent=0 // pred_region
    _
  $region13: #{vrwkv_classification_forward.34} parent=0 // pred_fallthru
    _
  // Predicated region
  $region14: #{vrwkv_classification_forward.34} parent=0 // pred_check
    _
  $region15: #{vrwkv_classification_forward.34} parent=0 // pred_check_branch
    %16 = sbr.rel (0) target = $region17
  $region16: #{vrwkv_classification_forward.34} parent=0 // pred_region
    _
  $region17: #{vrwkv_classification_forward.34} parent=0 // pred_fallthru
    _
  %p18 = scmp.eq.s32.totalorder 0, 0
  // Predicated region
  $region18: #{vrwkv_classification_forward.34} parent=0 // pred_check
    %p19 = pneg %p18
  $region19: #{vrwkv_classification_forward.34} parent=0 // pred_check_branch
    %21 = sbr.rel (%p19) target = $region21
  $region20: #{vrwkv_classification_forward.34} parent=0 // pred_region
    %22 = vst [vmem:[#allocation2] sm:$0xff] 0.0
    %23 = vst [vmem:[#allocation2 + $0x8] sm:$0xff] 0.0
    %24 = vst [vmem:[#allocation2 + $0x10] sm:$0xff] 0.0
    %25 = vst [vmem:[#allocation2 + $0x18] sm:$0xff] 0.0
  $region21: #{vrwkv_classification_forward.34} parent=0 // pred_fallthru
    _
  %v26 = vld [vmem:[%s2] sm:$0x1]
  %v27 = vld [vmem:[%s0] sm:$0xff]
  %v28 = vld [vmem:[%s0 + $0x8] sm:$0xff]
  %v29 = vld [vmem:[%s0 + $0x10] sm:$0xff]
  %v30 = vld [vmem:[%s0 + $0x18] sm:$0xff]
  %v32 = vperm.slane %v26, 0
  %v34 = vmul.f32 %v27, %v32
  %v35 = vmul.f32 %v28, %v32
  %v36 = vmul.f32 %v29, %v32
  %v37 = vmul.f32 %v30, %v32
  %v38 = vld [vmem:[%s1] sm:$0xff]
  %v39 = vld [vmem:[%s1 + $0x8] sm:$0xff]
  %v40 = vld [vmem:[%s1 + $0x10] sm:$0xff]
  %v41 = vld [vmem:[%s1 + $0x18] sm:$0xff]
  %v42 = vsub.f32 1.0, %v26
  %v44 = vperm.slane %v42, 0
  %v46 = vmul.f32 %v38, %v44
  %v47 = vmul.f32 %v39, %v44
  %v48 = vmul.f32 %v40, %v44
  %v49 = vmul.f32 %v41, %v44
  %v50 = vadd.f32 %v34, %v46
  %v51 = vadd.f32 %v35, %v47
  %v52 = vadd.f32 %v36, %v48
  %v53 = vadd.f32 %v37, %v49
  %v54 = vld [vmem:[#allocation2] sm:$0xff]
  %v55 = vld [vmem:[#allocation2 + $0x8] sm:$0xff]
  %v56 = vld [vmem:[#allocation2 + $0x10] sm:$0xff]
  %v57 = vld [vmem:[#allocation2 + $0x18] sm:$0xff]
  %v58 = vpack.c.bf16 %v51, %v50
  %v59 = vpack.c.bf16 %v53, %v52
  %v60 = vld [vmem:[%s3] sm:$0xf]
  %v61 = vld [vmem:[%s3 + $0x4] sm:$0xf]
  %v62 = vld [vmem:[%s3 + $0x8] sm:$0xf]
  %v63 = vld [vmem:[%s3 + $0xc] sm:$0xf]
  %v68 = vunpack.c.l.b16 %v60
  %v69 = vunpack.c.l.b16 %v61
  %v70 = vunpack.c.l.b16 %v62
  %v71 = vunpack.c.l.b16 %v63
  %v72 = vpack.c.b16 %v69, %v68
  %v73 = vpack.c.b16 %v71, %v70
  %vm76 = vcmask 261120
  %v78 = vsel %vm76, %v58, 0
  %v81 = vsel %vm76, %v59, 0
  %83 = vmatpush.bf16.msra.mxu0 0
  %84 = vmatpush.bf16.msra.mxu0 0
  %85 = vmatpush.bf16.msra.mxu0 0
  %86 = vmatpush.bf16.msra.mxu0 0
  %87 = vmatpush.bf16.msra.mxu0 0
  %88 = vmatpush.bf16.msra.mxu0 0
  %89 = vmatpush.bf16.msra.mxu0 %v73
  %90 = vmatpush.bf16.msra.mxu0 %v72
  %91 = vmatmul.bf16.gmra.mxu0 %v78
  %v92 = vpop.f32.mrf.mxu0
  %v93 = vadd.f32 0.0, %v92
  %v94 = vpop.f32.mrf.mxu0
  %v95 = vadd.f32 0.0, %v94
  %96 = vmatmul.bf16.gmra.mxu0 %v81
  %v97 = vpop.f32.mrf.mxu0
  %v98 = vadd.f32 0.0, %v97
  %v99 = vpop.f32.mrf.mxu0
  %v100 = vadd.f32 0.0, %v99
  %101 = vdwg.mxu0
  %v102 = vadd.f32 %v54, %v93
  %v103 = vadd.f32 %v55, %v95
  %v104 = vadd.f32 %v56, %v98
  %v105 = vadd.f32 %v57, %v100
  %106 = vst [vmem:[#allocation2] sm:$0xff] %v102
  %107 = vst [vmem:[#allocation2 + $0x8] sm:$0xff] %v103
  %108 = vst [vmem:[#allocation2 + $0x10] sm:$0xff] %v104
  %109 = vst [vmem:[#allocation2 + $0x18] sm:$0xff] %v105
  // Predicated region
  $region22: #{vrwkv_classification_forward.34} parent=0 // pred_check
    %p110 = pneg %p18
  $region23: #{vrwkv_classification_forward.34} parent=0 // pred_check_branch
    %112 = sbr.rel (%p110) target = $region25
  $region24: #{vrwkv_classification_forward.34} parent=0 // pred_region
    %v113 = vld [vmem:[#allocation2] sm:$0xff]
    %v114 = vld [vmem:[#allocation2 + $0x8] sm:$0xff]
    %v115 = vld [vmem:[#allocation2 + $0x10] sm:$0xff]
    %v116 = vld [vmem:[#allocation2 + $0x18] sm:$0xff]
    %117 = vst [vmem:[%s4] sm:$0xff] %v113
    %118 = vst [vmem:[%s4 + $0x8] sm:$0xff] %v114
    %119 = vst [vmem:[%s4 + $0x10] sm:$0xff] %v115
    %120 = vst [vmem:[%s4 + $0x18] sm:$0xff] %v116
  $region25: #{vrwkv_classification_forward.34} parent=0 // pred_fallthru
    _
  // Predicated region
  $region26: #{vrwkv_classification_forward.34} parent=0 // pred_check
    _
  $region27: #{vrwkv_classification_forward.34} parent=0 // pred_check_branch
    %122 = sbr.rel (0) target = $region29
  $region28: #{vrwkv_classification_forward.34} parent=0 // pred_region
    _
  $region29: #{vrwkv_classification_forward.34} parent=0 // pred_fallthru
    _
  // Predicated region
  $region30: #{vrwkv_classification_forward.34} parent=0 // pred_check
    _
  $region31: #{vrwkv_classification_forward.34} parent=0 // pred_check_branch
    %124 = sbr.rel (0) target = $region33
  $region32: #{vrwkv_classification_forward.34} parent=0 // pred_region
    _
  $region33: #{vrwkv_classification_forward.34} parent=0 // pred_fallthru
    _

// kernel: vrwkv_classification_forward.32
$region0: #{vrwkv_classification_forward.32}
  #allocation0 [shape = 'u32[]', space=smem, size = 0x4, offset = 0x4, fixed_abs, tag = 'smem constant byte address 0x4 - core index']
  #allocation1 [shape = 'u32[72,128]{1,0:T(1,128)}', space=vmem, size = 0x9000, scoped, tag = 'internal scratch']
  %s0 = inlined_call_operand.vmem [shape: f32[32,32], index: 0, kind: input, shape index: {}]
  %s1 = inlined_call_operand.vmem [shape: f32[32,32], index: 1, kind: input, shape index: {}]
  %s2 = inlined_call_operand.vmem [shape: f32[1,32], index: 2, kind: input, shape index: {}]
  %s3 = inlined_call_operand.vmem [shape: f32[1,32], index: 3, kind: input, shape index: {}]
  %s4 = inlined_call_operand.vmem [shape: bf16[32,32], index: 4, kind: input, shape index: {}]
  %s5 = inlined_call_operand.vmem [shape: f32[32,32], index: 5, kind: output, shape index: {}]
  %s6 = sld [smem:[#allocation0]]
  $region30: #{vrwkv_classification_forward.32} parent=0
    _
  %s8 = ssub.s32 1, %s6
  %s9 = scalar_select 0, %s8, %s6
  // Predicated region
  $region2: #{vrwkv_classification_forward.32} parent=0 // pred_check
    _
  $region3: #{vrwkv_classification_forward.32} parent=0 // pred_check_branch
    %11 = sbr.rel (0) target = $region5
  $region4: #{vrwkv_classification_forward.32} parent=0 // pred_region
    _
  $region5: #{vrwkv_classification_forward.32} parent=0 // pred_fallthru
    _
  // Predicated region
  $region6: #{vrwkv_classification_forward.32} parent=0 // pred_check
    _
  $region7: #{vrwkv_classification_forward.32} parent=0 // pred_check_branch
    %13 = sbr.rel (0) target = $region9
  $region8: #{vrwkv_classification_forward.32} parent=0 // pred_region
    _
  $region9: #{vrwkv_classification_forward.32} parent=0 // pred_fallthru
    _
  // Predicated region
  $region10: #{vrwkv_classification_forward.32} parent=0 // pred_check
    _
  $region11: #{vrwkv_classification_forward.32} parent=0 // pred_check_branch
    %15 = sbr.rel (0) target = $region13
  $region12: #{vrwkv_classification_forward.32} parent=0 // pred_region
    _
  $region13: #{vrwkv_classification_forward.32} parent=0 // pred_fallthru
    _
  // Predicated region
  $region14: #{vrwkv_classification_forward.32} parent=0 // pred_check
    _
  $region15: #{vrwkv_classification_forward.32} parent=0 // pred_check_branch
    %17 = sbr.rel (0) target = $region17
  $region16: #{vrwkv_classification_forward.32} parent=0 // pred_region
    _
  $region17: #{vrwkv_classification_forward.32} parent=0 // pred_fallthru
    _
  // Predicated region
  $region18: #{vrwkv_classification_forward.32} parent=0 // pred_check
    _
  $region19: #{vrwkv_classification_forward.32} parent=0 // pred_check_branch
    %19 = sbr.rel (0) target = $region21
  $region20: #{vrwkv_classification_forward.32} parent=0 // pred_region
    _
  $region21: #{vrwkv_classification_forward.32} parent=0 // pred_fallthru
    _
  %v21 = vld [vmem:[%s0] sm:$0xff]
  %v22 = vld [vmem:[%s0 + $0x8] sm:$0xff]
  %v23 = vld [vmem:[%s0 + $0x10] sm:$0xff]
  %v24 = vld [vmem:[%s0 + $0x18] sm:$0xff]
  %vm25 = vcmask 261120
  %v26 = vsel %vm25, %v21, 0.0
  %27 = vadd.xlane.f32.xlu0 %v26
  %v28 = vpop.xlane.xlu0 %27
  %v29 = vsel %vm25, %v22, 0.0
  %30 = vadd.xlane.f32.xlu0 %v29
  %v31 = vpop.xlane.xlu0 %30
  %v32 = vsel %vm25, %v23, 0.0
  %33 = vadd.xlane.f32.xlu0 %v32
  %v34 = vpop.xlane.xlu0 %33
  %v35 = vsel %vm25, %v24, 0.0
  %36 = vadd.xlane.f32.xlu0 %v35
  %v37 = vpop.xlane.xlu0 %36
  %v38 = vrcp.pop 32.0
  %v39 = vmul.f32 32.0, %v38
  %v40 = vsub.f32 1.0, %v39
  %v41 = vmul.f32 %v38, %v40
  %v42 = vadd.f32 %v38, %v41
  %vm43 = vweird.f32 %v38
  %v44 = vsel %vm43, %v38, %v42
  %v45 = vmul.f32 %v28, %v44
  %v46 = vmul.f32 %v31, %v44
  %v47 = vmul.f32 %v34, %v44
  %v48 = vmul.f32 %v37, %v44
  %v49 = vsub.f32 %v21, %v45
  %v50 = vsub.f32 %v22, %v46
  %v51 = vsub.f32 %v23, %v47
  %v52 = vsub.f32 %v24, %v48
  %v53 = vmul.f32 %v49, %v49
  %v54 = vmul.f32 %v50, %v50
  %v55 = vmul.f32 %v51, %v51
  %v56 = vmul.f32 %v52, %v52
  %v57 = vsel %vm25, %v53, 0.0
  %58 = vadd.xlane.f32.xlu0 %v57
  %v59 = vpop.xlane.xlu0 %58
  %v60 = vsel %vm25, %v54, 0.0
  %61 = vadd.xlane.f32.xlu0 %v60
  %v62 = vpop.xlane.xlu0 %61
  %v63 = vsel %vm25, %v55, 0.0
  %64 = vadd.xlane.f32.xlu0 %v63
  %v65 = vpop.xlane.xlu0 %64
  %v66 = vsel %vm25, %v56, 0.0
  %67 = vadd.xlane.f32.xlu0 %v66
  %v68 = vpop.xlane.xlu0 %67
  %v69 = vmul.f32 %v59, %v44
  %v70 = vmul.f32 %v62, %v44
  %v71 = vmul.f32 %v65, %v44
  %v72 = vmul.f32 %v68, %v44
  %v73 = vadd.f32 %v69, 1e-05
  %v74 = vadd.f32 %v70, 1e-05
  %v75 = vadd.f32 %v71, 1e-05
  %v76 = vadd.f32 %v72, 1e-05
  %v77 = vrsqrt.pop %v73
  %v78 = vmul.f32 %v77, %v73
  %v79 = vmul.f32 %v78, %v77
  %v80 = vmul.f32 0.5, %v79
  %v81 = vsub.f32 1.5, %v80
  %v82 = vmul.f32 %v77, %v81
  %vm83 = vweird.f32 %v73
  %vm84 = vweird.f32 %v77
  %vm85 = vmor %vm83, %vm84
  %v86 = vsel %vm85, %v77, %v82
  %v87 = vrsqrt.pop %v74
  %v88 = vmul.f32 %v87, %v74
  %v89 = vmul.f32 %v88, %v87
  %v90 = vmul.f32 0.5, %v89
  %v91 = vsub.f32 1.5, %v90
  %v92 = vmul.f32 %v87, %v91
  %vm93 = vweird.f32 %v74
  %vm94 = vweird.f32 %v87
  %vm95 = vmor %vm93, %vm94
  %v96 = vsel %vm95, %v87, %v92
  %v97 = vrsqrt.pop %v75
  %v98 = vmul.f32 %v97, %v75
  %v99 = vmul.f32 %v98, %v97
  %v100 = vmul.f32 0.5, %v99
  %v101 = vsub.f32 1.5, %v100
  %v102 = vmul.f32 %v97, %v101
  %vm103 = vweird.f32 %v75
  %vm104 = vweird.f32 %v97
  %vm105 = vmor %vm103, %vm104
  %v106 = vsel %vm105, %v97, %v102
  %v107 = vrsqrt.pop %v76
  %v108 = vmul.f32 %v107, %v76
  %v109 = vmul.f32 %v108, %v107
  %v110 = vmul.f32 0.5, %v109
  %v111 = vsub.f32 1.5, %v110
  %v112 = vmul.f32 %v107, %v111
  %vm113 = vweird.f32 %v76
  %vm114 = vweird.f32 %v107
  %vm115 = vmor %vm113, %vm114
  %v116 = vsel %vm115, %v107, %v112
  %v117 = vmul.f32 %v49, %v86
  %v118 = vmul.f32 %v50, %v96
  %v119 = vmul.f32 %v51, %v106
  %v120 = vmul.f32 %v52, %v116
  %v121 = vld [vmem:[%s2] sm:$0x1]
  %v123 = vperm.slane %v121, 0
  %v125 = vmul.f32 %v117, %v123
  %v126 = vmul.f32 %v118, %v123
  %v127 = vmul.f32 %v119, %v123
  %v128 = vmul.f32 %v120, %v123
  %v129 = vld [vmem:[%s3] sm:$0x1]
  %v131 = vperm.slane %v129, 0
  %v133 = vadd.f32 %v125, %v131
  %v134 = vadd.f32 %v126, %v131
  %v135 = vadd.f32 %v127, %v131
  %v136 = vadd.f32 %v128, %v131
  %v137 = vld [vmem:[%s1] sm:$0xff]
  %v138 = vld [vmem:[%s1 + $0x8] sm:$0xff]
  %v139 = vld [vmem:[%s1 + $0x10] sm:$0xff]
  %v140 = vld [vmem:[%s1 + $0x18] sm:$0xff]
  %v141 = vxor.u32 %v137, 2147483648
  %v142 = vxor.u32 %v138, 2147483648
  %v143 = vxor.u32 %v139, 2147483648
  %v144 = vxor.u32 %v140, 2147483648
  %v145 = vmul.f32 %v141, 1.442695
  %v146 = vpow.pop %v145
  %v147 = vmul.f32 %v142, 1.442695
  %v148 = vpow.pop %v147
  %v149 = vmul.f32 %v143, 1.442695
  %v150 = vpow.pop %v149
  %v151 = vmul.f32 %v144, 1.442695
  %v152 = vpow.pop %v151
  %v153 = vadd.f32 %v146, 1.0
  %v154 = vadd.f32 %v148, 1.0
  %v155 = vadd.f32 %v150, 1.0
  %v156 = vadd.f32 %v152, 1.0
  %v157 = vrcp.pop %v153
  %v158 = vmul.f32 %v153, %v157
  %v159 = vsub.f32 1.0, %v158
  %v160 = vmul.f32 %v157, %v159
  %v161 = vadd.f32 %v157, %v160
  %vm162 = vweird.f32 %v153
  %vm163 = vweird.f32 %v157
  %vm164 = vmor %vm162, %vm163
  %v165 = vsel %vm164, %v157, %v161
  %v166 = vand.u32 2147483647, %v153
  %vm167 = vcmp.eq.f32.partialorder %v166, 8.507059e+37
  %v168 = vand.u32 %v153, 2147483648
  %v169 = vor.u32 1.1754944e-38, %v168
  %v170 = vsel %vm167, %v169, %v165
  %v171 = vmul.f32 1.0, %v170
  %v172 = vrcp.pop %v154
  %v173 = vmul.f32 %v154, %v172
  %v174 = vsub.f32 1.0, %v173
  %v175 = vmul.f32 %v172, %v174
  %v176 = vadd.f32 %v172, %v175
  %vm177 = vweird.f32 %v154
  %vm178 = vweird.f32 %v172
  %vm179 = vmor %vm177, %vm178
  %v180 = vsel %vm179, %v172, %v176
  %v181 = vand.u32 2147483647, %v154
  %vm182 = vcmp.eq.f32.partialorder %v181, 8.507059e+37
  %v183 = vand.u32 %v154, 2147483648
  %v184 = vor.u32 1.1754944e-38, %v183
  %v185 = vsel %vm182, %v184, %v180
  %v186 = vmul.f32 1.0, %v185
  %v187 = vrcp.pop %v155
  %v188 = vmul.f32 %v155, %v187
  %v189 = vsub.f32 1.0, %v188
  %v190 = vmul.f32 %v187, %v189
  %v191 = vadd.f32 %v187, %v190
  %vm192 = vweird.f32 %v155
  %vm193 = vweird.f32 %v187
  %vm194 = vmor %vm192, %vm193
  %v195 = vsel %vm194, %v187, %v191
  %v196 = vand.u32 2147483647, %v155
  %vm197 = vcmp.eq.f32.partialorder %v196, 8.507059e+37
  %v198 = vand.u32 %v155, 2147483648
  %v199 = vor.u32 1.1754944e-38, %v198
  %v200 = vsel %vm197, %v199, %v195
  %v201 = vmul.f32 1.0, %v200
  %v202 = vrcp.pop %v156
  %v203 = vmul.f32 %v156, %v202
  %v204 = vsub.f32 1.0, %v203
  %v205 = vmul.f32 %v202, %v204
  %v206 = vadd.f32 %v202, %v205
  %vm207 = vweird.f32 %v156
  %vm208 = vweird.f32 %v202
  %vm209 = vmor %vm207, %vm208
  %v210 = vsel %vm209, %v202, %v206
  %v211 = vand.u32 2147483647, %v156
  %vm212 = vcmp.eq.f32.partialorder %v211, 8.507059e+37
  %v213 = vand.u32 %v156, 2147483648
  %v214 = vor.u32 1.1754944e-38, %v213
  %v215 = vsel %vm212, %v214, %v210
  %v216 = vmul.f32 1.0, %v215
  %v217 = vmul.f32 %v171, %v133
  %v218 = vmul.f32 %v186, %v134
  %v219 = vmul.f32 %v201, %v135
  %v220 = vmul.f32 %v216, %v136
  %v221 = vpack.c.bf16 %v218, %v217
  %v222 = vpack.c.bf16 %v220, %v219
  %v223 = vld [vmem:[%s4] sm:$0xf]
  %v224 = vld [vmem:[%s4 + $0x4] sm:$0xf]
  %v225 = vld [vmem:[%s4 + $0x8] sm:$0xf]
  %v226 = vld [vmem:[%s4 + $0xc] sm:$0xf]
  %v231 = vunpack.c.l.b16 %v223
  %v232 = vunpack.c.l.b16 %v224
  %v233 = vunpack.c.l.b16 %v225
  %v234 = vunpack.c.l.b16 %v226
  %v235 = vpack.c.b16 %v232, %v231
  %v236 = vpack.c.b16 %v234, %v233
  %v240 = vsel %vm25, %v221, 0
  %v243 = vsel %vm25, %v222, 0
  %245 = vmatpush.bf16.msra.mxu0 0
  %246 = vmatpush.bf16.msra.mxu0 0
  %247 = vmatpush.bf16.msra.mxu0 0
  %248 = vmatpush.bf16.msra.mxu0 0
  %249 = vmatpush.bf16.msra.mxu0 0
  %250 = vmatpush.bf16.msra.mxu0 0
  %251 = vmatpush.bf16.msra.mxu0 %v236
  %252 = vmatpush.bf16.msra.mxu0 %v235
  %253 = vmatmul.bf16.gmra.mxu0 %v240
  %v254 = vpop.f32.mrf.mxu0
  %v255 = vadd.f32 0.0, %v254
  %v256 = vpop.f32.mrf.mxu0
  %v257 = vadd.f32 0.0, %v256
  %258 = vmatmul.bf16.gmra.mxu0 %v243
  %v259 = vpop.f32.mrf.mxu0
  %v260 = vadd.f32 0.0, %v259
  %v261 = vpop.f32.mrf.mxu0
  %v262 = vadd.f32 0.0, %v261
  %263 = vdwg.mxu0
  %264 = vst.msk [vmem:[%s5] sm:$0xff] %vm25, %v255
  %265 = vst.msk [vmem:[%s5 + $0x8] sm:$0xff] %vm25, %v257
  %266 = vst.msk [vmem:[%s5 + $0x10] sm:$0xff] %vm25, %v260
  %267 = vst.msk [vmem:[%s5 + $0x18] sm:$0xff] %vm25, %v262
  // Predicated region
  $region22: #{vrwkv_classification_forward.32} parent=0 // pred_check
    _
  $region23: #{vrwkv_classification_forward.32} parent=0 // pred_check_branch
    %269 = sbr.rel (0) target = $region25
  $region24: #{vrwkv_classification_forward.32} parent=0 // pred_region
    _
  $region25: #{vrwkv_classification_forward.32} parent=0 // pred_fallthru
    _
  // Predicated region
  $region26: #{vrwkv_classification_forward.32} parent=0 // pred_check
    _
  $region27: #{vrwkv_classification_forward.32} parent=0 // pred_check_branch
    %271 = sbr.rel (0) target = $region29
  $region28: #{vrwkv_classification_forward.32} parent=0 // pred_region
    _
  $region29: #{vrwkv_classification_forward.32} parent=0 // pred_fallthru
    _

// kernel: vrwkv_classification_forward.36
$region0: #{vrwkv_classification_forward.36}
  #allocation0 [shape = 'u32[]', space=smem, size = 0x4, offset = 0x4, fixed_abs, tag = 'smem constant byte address 0x4 - core index']
  #allocation1 [shape = 'u32[72,128]{1,0:T(1,128)}', space=vmem, size = 0x9000, scoped, tag = 'internal scratch']
  %s0 = inlined_call_operand.vmem [shape: f32[32,128], index: 0, kind: input, shape index: {}]
  %s1 = inlined_call_operand.vmem [shape: f32[1,128], index: 1, kind: input, shape index: {}]
  %s2 = inlined_call_operand.vmem [shape: f32[1,128], index: 2, kind: input, shape index: {}]
  %s3 = inlined_call_operand.vmem [shape: bf16[128,32], index: 3, kind: input, shape index: {}]
  %s4 = inlined_call_operand.vmem [shape: f32[32,32], index: 4, kind: input, shape index: {}]
  %s5 = inlined_call_operand.vmem [shape: f32[32,32], index: 5, kind: output, shape index: {}]
  %s6 = sld [smem:[#allocation0]]
  $region30: #{vrwkv_classification_forward.36} parent=0
    _
  %s8 = ssub.s32 1, %s6
  %s9 = scalar_select 0, %s8, %s6
  // Predicated region
  $region2: #{vrwkv_classification_forward.36} parent=0 // pred_check
    _
  $region3: #{vrwkv_classification_forward.36} parent=0 // pred_check_branch
    %11 = sbr.rel (0) target = $region5
  $region4: #{vrwkv_classification_forward.36} parent=0 // pred_region
    _
  $region5: #{vrwkv_classification_forward.36} parent=0 // pred_fallthru
    _
  // Predicated region
  $region6: #{vrwkv_classification_forward.36} parent=0 // pred_check
    _
  $region7: #{vrwkv_classification_forward.36} parent=0 // pred_check_branch
    %13 = sbr.rel (0) target = $region9
  $region8: #{vrwkv_classification_forward.36} parent=0 // pred_region
    _
  $region9: #{vrwkv_classification_forward.36} parent=0 // pred_fallthru
    _
  // Predicated region
  $region10: #{vrwkv_classification_forward.36} parent=0 // pred_check
    _
  $region11: #{vrwkv_classification_forward.36} parent=0 // pred_check_branch
    %15 = sbr.rel (0) target = $region13
  $region12: #{vrwkv_classification_forward.36} parent=0 // pred_region
    _
  $region13: #{vrwkv_classification_forward.36} parent=0 // pred_fallthru
    _
  // Predicated region
  $region14: #{vrwkv_classification_forward.36} parent=0 // pred_check
    _
  $region15: #{vrwkv_classification_forward.36} parent=0 // pred_check_branch
    %17 = sbr.rel (0) target = $region17
  $region16: #{vrwkv_classification_forward.36} parent=0 // pred_region
    _
  $region17: #{vrwkv_classification_forward.36} parent=0 // pred_fallthru
    _
  // Predicated region
  $region18: #{vrwkv_classification_forward.36} parent=0 // pred_check
    _
  $region19: #{vrwkv_classification_forward.36} parent=0 // pred_check_branch
    %19 = sbr.rel (0) target = $region21
  $region20: #{vrwkv_classification_forward.36} parent=0 // pred_region
    _
  $region21: #{vrwkv_classification_forward.36} parent=0 // pred_fallthru
    _
  %v20 = vld [vmem:[%s0] sm:$0xff]
  %v21 = vld [vmem:[%s0 + $0x8] sm:$0xff]
  %v22 = vld [vmem:[%s0 + $0x10] sm:$0xff]
  %v23 = vld [vmem:[%s0 + $0x18] sm:$0xff]
  %v24 = vmax.f32 %v20, 0.0
  %v25 = vmax.f32 %v21, 0.0
  %v26 = vmax.f32 %v22, 0.0
  %v27 = vmax.f32 %v23, 0.0
  %v28 = vmul.f32 %v24, %v24
  %v29 = vmul.f32 %v25, %v25
  %v30 = vmul.f32 %v26, %v26
  %v31 = vmul.f32 %v27, %v27
  %32 = vadd.xlane.f32.xlu0 %v28
  %v33 = vpop.xlane.xlu0 %32
  %34 = vadd.xlane.f32.xlu0 %v29
  %v35 = vpop.xlane.xlu0 %34
  %36 = vadd.xlane.f32.xlu0 %v30
  %v37 = vpop.xlane.xlu0 %36
  %38 = vadd.xlane.f32.xlu0 %v31
  %v39 = vpop.xlane.xlu0 %38
  %v40 = vrcp.pop 128.0
  %v41 = vmul.f32 128.0, %v40
  %v42 = vsub.f32 1.0, %v41
  %v43 = vmul.f32 %v40, %v42
  %v44 = vadd.f32 %v40, %v43
  %vm45 = vweird.f32 %v40
  %v46 = vsel %vm45, %v40, %v44
  %v47 = vmul.f32 %v33, %v46
  %v48 = vmul.f32 %v35, %v46
  %v49 = vmul.f32 %v37, %v46
  %v50 = vmul.f32 %v39, %v46
  %v51 = vsub.f32 %v28, %v47
  %v52 = vsub.f32 %v29, %v48
  %v53 = vsub.f32 %v30, %v49
  %v54 = vsub.f32 %v31, %v50
  %v55 = vmul.f32 %v51, %v51
  %v56 = vmul.f32 %v52, %v52
  %v57 = vmul.f32 %v53, %v53
  %v58 = vmul.f32 %v54, %v54
  %59 = vadd.xlane.f32.xlu0 %v55
  %v60 = vpop.xlane.xlu0 %59
  %61 = vadd.xlane.f32.xlu0 %v56
  %v62 = vpop.xlane.xlu0 %61
  %63 = vadd.xlane.f32.xlu0 %v57
  %v64 = vpop.xlane.xlu0 %63
  %65 = vadd.xlane.f32.xlu0 %v58
  %v66 = vpop.xlane.xlu0 %65
  %v67 = vmul.f32 %v60, %v46
  %v68 = vmul.f32 %v62, %v46
  %v69 = vmul.f32 %v64, %v46
  %v70 = vmul.f32 %v66, %v46
  %v71 = vadd.f32 %v67, 1e-05
  %v72 = vadd.f32 %v68, 1e-05
  %v73 = vadd.f32 %v69, 1e-05
  %v74 = vadd.f32 %v70, 1e-05
  %v75 = vrsqrt.pop %v71
  %v76 = vmul.f32 %v75, %v71
  %v77 = vmul.f32 %v76, %v75
  %v78 = vmul.f32 0.5, %v77
  %v79 = vsub.f32 1.5, %v78
  %v80 = vmul.f32 %v75, %v79
  %vm81 = vweird.f32 %v71
  %vm82 = vweird.f32 %v75
  %vm83 = vmor %vm81, %vm82
  %v84 = vsel %vm83, %v75, %v80
  %v85 = vrsqrt.pop %v72
  %v86 = vmul.f32 %v85, %v72
  %v87 = vmul.f32 %v86, %v85
  %v88 = vmul.f32 0.5, %v87
  %v89 = vsub.f32 1.5, %v88
  %v90 = vmul.f32 %v85, %v89
  %vm91 = vweird.f32 %v72
  %vm92 = vweird.f32 %v85
  %vm93 = vmor %vm91, %vm92
  %v94 = vsel %vm93, %v85, %v90
  %v95 = vrsqrt.pop %v73
  %v96 = vmul.f32 %v95, %v73
  %v97 = vmul.f32 %v96, %v95
  %v98 = vmul.f32 0.5, %v97
  %v99 = vsub.f32 1.5, %v98
  %v100 = vmul.f32 %v95, %v99
  %vm101 = vweird.f32 %v73
  %vm102 = vweird.f32 %v95
  %vm103 = vmor %vm101, %vm102
  %v104 = vsel %vm103, %v95, %v100
  %v105 = vrsqrt.pop %v74
  %v106 = vmul.f32 %v105, %v74
  %v107 = vmul.f32 %v106, %v105
  %v108 = vmul.f32 0.5, %v107
  %v109 = vsub.f32 1.5, %v108
  %v110 = vmul.f32 %v105, %v109
  %vm111 = vweird.f32 %v74
  %vm112 = vweird.f32 %v105
  %vm113 = vmor %vm111, %vm112
  %v114 = vsel %vm113, %v105, %v110
  %v115 = vmul.f32 %v51, %v84
  %v116 = vmul.f32 %v52, %v94
  %v117 = vmul.f32 %v53, %v104
  %v118 = vmul.f32 %v54, %v114
  %v119 = vld [vmem:[%s1] sm:$0x1]
  %v121 = vperm.slane %v119, 0
  %v123 = vmul.f32 %v115, %v121
  %v124 = vmul.f32 %v116, %v121
  %v125 = vmul.f32 %v117, %v121
  %v126 = vmul.f32 %v118, %v121
  %v127 = vld [vmem:[%s2] sm:$0x1]
  %v129 = vperm.slane %v127, 0
  %v131 = vadd.f32 %v123, %v129
  %v132 = vadd.f32 %v124, %v129
  %v133 = vadd.f32 %v125, %v129
  %v134 = vadd.f32 %v126, %v129
  %v135 = vpack.c.bf16 %v132, %v131
  %v136 = vpack.c.bf16 %v134, %v133
  %v137 = vld [vmem:[%s3] sm:$0xf]
  %v138 = vld [vmem:[%s3 + $0x4] sm:$0xf]
  %v139 = vld [vmem:[%s3 + $0x8] sm:$0xf]
  %v140 = vld [vmem:[%s3 + $0xc] sm:$0xf]
  %v141 = vld [vmem:[%s3 + $0x10] sm:$0xf]
  %v142 = vld [vmem:[%s3 + $0x14] sm:$0xf]
  %v143 = vld [vmem:[%s3 + $0x18] sm:$0xf]
  %v144 = vld [vmem:[%s3 + $0x1c] sm:$0xf]
  %v145 = vld [vmem:[%s3 + $0x20] sm:$0xf]
  %v146 = vld [vmem:[%s3 + $0x24] sm:$0xf]
  %v147 = vld [vmem:[%s3 + $0x28] sm:$0xf]
  %v148 = vld [vmem:[%s3 + $0x2c] sm:$0xf]
  %v149 = vld [vmem:[%s3 + $0x30] sm:$0xf]
  %v150 = vld [vmem:[%s3 + $0x34] sm:$0xf]
  %v151 = vld [vmem:[%s3 + $0x38] sm:$0xf]
  %v152 = vld [vmem:[%s3 + $0x3c] sm:$0xf]
  %v169 = vunpack.c.l.b16 %v137
  %v170 = vunpack.c.l.b16 %v138
  %v171 = vunpack.c.l.b16 %v139
  %v172 = vunpack.c.l.b16 %v140
  %v173 = vunpack.c.l.b16 %v141
  %v174 = vunpack.c.l.b16 %v142
  %v175 = vunpack.c.l.b16 %v143
  %v176 = vunpack.c.l.b16 %v144
  %v177 = vunpack.c.l.b16 %v145
  %v178 = vunpack.c.l.b16 %v146
  %v179 = vunpack.c.l.b16 %v147
  %v180 = vunpack.c.l.b16 %v148
  %v181 = vunpack.c.l.b16 %v149
  %v182 = vunpack.c.l.b16 %v150
  %v183 = vunpack.c.l.b16 %v151
  %v184 = vunpack.c.l.b16 %v152
  %v185 = vpack.c.b16 %v170, %v169
  %v186 = vpack.c.b16 %v172, %v171
  %v187 = vpack.c.b16 %v174, %v173
  %v188 = vpack.c.b16 %v176, %v175
  %v189 = vpack.c.b16 %v178, %v177
  %v190 = vpack.c.b16 %v180, %v179
  %v191 = vpack.c.b16 %v182, %v181
  %v192 = vpack.c.b16 %v184, %v183
  %201 = vmatpush.bf16.msra.mxu0 %v192
  %202 = vmatpush.bf16.msra.mxu0 %v191
  %203 = vmatpush.bf16.msra.mxu0 %v190
  %204 = vmatpush.bf16.msra.mxu0 %v189
  %205 = vmatpush.bf16.msra.mxu0 %v188
  %206 = vmatpush.bf16.msra.mxu0 %v187
  %207 = vmatpush.bf16.msra.mxu0 %v186
  %208 = vmatpush.bf16.msra.mxu0 %v185
  %209 = vmatmul.bf16.gmra.mxu0 %v135
  %v210 = vpop.f32.mrf.mxu0
  %v211 = vadd.f32 0.0, %v210
  %v212 = vpop.f32.mrf.mxu0
  %v213 = vadd.f32 0.0, %v212
  %214 = vmatmul.bf16.gmra.mxu0 %v136
  %v215 = vpop.f32.mrf.mxu0
  %v216 = vadd.f32 0.0, %v215
  %v217 = vpop.f32.mrf.mxu0
  %v218 = vadd.f32 0.0, %v217
  %219 = vdwg.mxu0
  %v220 = vld [vmem:[%s4] sm:$0xff]
  %v221 = vld [vmem:[%s4 + $0x8] sm:$0xff]
  %v222 = vld [vmem:[%s4 + $0x10] sm:$0xff]
  %v223 = vld [vmem:[%s4 + $0x18] sm:$0xff]
  %v224 = vxor.u32 %v220, 2147483648
  %v225 = vxor.u32 %v221, 2147483648
  %v226 = vxor.u32 %v222, 2147483648
  %v227 = vxor.u32 %v223, 2147483648
  %v228 = vmul.f32 %v224, 1.442695
  %v229 = vpow.pop %v228
  %v230 = vmul.f32 %v225, 1.442695
  %v231 = vpow.pop %v230
  %v232 = vmul.f32 %v226, 1.442695
  %v233 = vpow.pop %v232
  %v234 = vmul.f32 %v227, 1.442695
  %v235 = vpow.pop %v234
  %v236 = vadd.f32 %v229, 1.0
  %v237 = vadd.f32 %v231, 1.0
  %v238 = vadd.f32 %v233, 1.0
  %v239 = vadd.f32 %v235, 1.0
  %v240 = vrcp.pop %v236
  %v241 = vmul.f32 %v236, %v240
  %v242 = vsub.f32 1.0, %v241
  %v243 = vmul.f32 %v240, %v242
  %v244 = vadd.f32 %v240, %v243
  %vm245 = vweird.f32 %v236
  %vm246 = vweird.f32 %v240
  %vm247 = vmor %vm245, %vm246
  %v248 = vsel %vm247, %v240, %v244
  %v249 = vand.u32 2147483647, %v236
  %vm250 = vcmp.eq.f32.partialorder %v249, 8.507059e+37
  %v251 = vand.u32 %v236, 2147483648
  %v252 = vor.u32 1.1754944e-38, %v251
  %v253 = vsel %vm250, %v252, %v248
  %v254 = vmul.f32 1.0, %v253
  %v255 = vrcp.pop %v237
  %v256 = vmul.f32 %v237, %v255
  %v257 = vsub.f32 1.0, %v256
  %v258 = vmul.f32 %v255, %v257
  %v259 = vadd.f32 %v255, %v258
  %vm260 = vweird.f32 %v237
  %vm261 = vweird.f32 %v255
  %vm262 = vmor %vm260, %vm261
  %v263 = vsel %vm262, %v255, %v259
  %v264 = vand.u32 2147483647, %v237
  %vm265 = vcmp.eq.f32.partialorder %v264, 8.507059e+37
  %v266 = vand.u32 %v237, 2147483648
  %v267 = vor.u32 1.1754944e-38, %v266
  %v268 = vsel %vm265, %v267, %v263
  %v269 = vmul.f32 1.0, %v268
  %v270 = vrcp.pop %v238
  %v271 = vmul.f32 %v238, %v270
  %v272 = vsub.f32 1.0, %v271
  %v273 = vmul.f32 %v270, %v272
  %v274 = vadd.f32 %v270, %v273
  %vm275 = vweird.f32 %v238
  %vm276 = vweird.f32 %v270
  %vm277 = vmor %vm275, %vm276
  %v278 = vsel %vm277, %v270, %v274
  %v279 = vand.u32 2147483647, %v238
  %vm280 = vcmp.eq.f32.partialorder %v279, 8.507059e+37
  %v281 = vand.u32 %v238, 2147483648
  %v282 = vor.u32 1.1754944e-38, %v281
  %v283 = vsel %vm280, %v282, %v278
  %v284 = vmul.f32 1.0, %v283
  %v285 = vrcp.pop %v239
  %v286 = vmul.f32 %v239, %v285
  %v287 = vsub.f32 1.0, %v286
  %v288 = vmul.f32 %v285, %v287
  %v289 = vadd.f32 %v285, %v288
  %vm290 = vweird.f32 %v239
  %vm291 = vweird.f32 %v285
  %vm292 = vmor %vm290, %vm291
  %v293 = vsel %vm292, %v285, %v289
  %v294 = vand.u32 2147483647, %v239
  %vm295 = vcmp.eq.f32.partialorder %v294, 8.507059e+37
  %v296 = vand.u32 %v239, 2147483648
  %v297 = vor.u32 1.1754944e-38, %v296
  %v298 = vsel %vm295, %v297, %v293
  %v299 = vmul.f32 1.0, %v298
  %v300 = vmul.f32 %v254, %v211
  %v301 = vmul.f32 %v269, %v213
  %v302 = vmul.f32 %v284, %v216
  %v303 = vmul.f32 %v299, %v218
  %vm304 = vcmask 261120
  %305 = vst.msk [vmem:[%s5] sm:$0xff] %vm304, %v300
  %306 = vst.msk [vmem:[%s5 + $0x8] sm:$0xff] %vm304, %v301
  %307 = vst.msk [vmem:[%s5 + $0x10] sm:$0xff] %vm304, %v302
  %308 = vst.msk [vmem:[%s5 + $0x18] sm:$0xff] %vm304, %v303
  // Predicated region
  $region22: #{vrwkv_classification_forward.36} parent=0 // pred_check
    _
  $region23: #{vrwkv_classification_forward.36} parent=0 // pred_check_branch
    %310 = sbr.rel (0) target = $region25
  $region24: #{vrwkv_classification_forward.36} parent=0 // pred_region
    _
  $region25: #{vrwkv_classification_forward.36} parent=0 // pred_fallthru
    _
  // Predicated region
  $region26: #{vrwkv_classification_forward.36} parent=0 // pred_check
    _
  $region27: #{vrwkv_classification_forward.36} parent=0 // pred_check_branch
    %312 = sbr.rel (0) target = $region29
  $region28: #{vrwkv_classification_forward.36} parent=0 // pred_region
    _
  $region29: #{vrwkv_classification_forward.36} parent=0 // pred_fallthru
    _

// kernel: vrwkv_classification_forward.48
$region0: #{vrwkv_classification_forward.48}
  #allocation0 [shape = 'u32[]', space=smem, size = 0x4, offset = 0x4, fixed_abs, tag = 'smem constant byte address 0x4 - core index']
  #allocation1 [shape = 'u32[72,128]{1,0:T(1,128)}', space=vmem, size = 0x9000, scoped, tag = 'internal scratch']
  %s0 = inlined_call_operand.vmem [shape: f32[2,16,32], index: 0, kind: input, shape index: {}]
  %s1 = inlined_call_operand.vmem [shape: f32[2,1,32], index: 1, kind: output, shape index: {}]
  %s2 = sld [smem:[#allocation0]]
  $region37: #{vrwkv_classification_forward.48} parent=0
    _
  %s4 = ssub.s32 1, %s2
  %s5 = scalar_select 0, %s4, %s2
  loop: start=0, step=1, limit=4
  $region2: #{vrwkv_classification_forward.48} parent=0 // loop_pre_header
    _
  $region3: #{vrwkv_classification_forward.48} parent=0 // loop_header
    %s7 = sphi 0, %s11
    %p8 = scmp.ge.s32.totalorder %s7, 4
    %s17 = sphi 0, %s19
    %s20 = sphi 0, %s17
    %s21 = sphi 0, %s20
    %s37 = sphi 0, %s21
    %s43 = sphi 0, %s45
    %s46 = sphi 0, %s43
    %s47 = sphi 0, %s46
    %s63 = sphi 0, %s47
  $region4: #{vrwkv_classification_forward.48} parent=0 // loop_header_branch
    %10 = sbr.rel (%p8) target = $region8
  $region5: #{vrwkv_classification_forward.48} parent=0 // loop_body
    %s12 = ssub.s32 %s7, 1
    %s13 = ssub.s32 %s7, 2
    %s14 = sadd.s32 %s7, 1
    %s15 = ssub.s32 %s7, %s14
    %p16 = scmp.eq.s32.totalorder %s15, 0
    %s18 = sadd.s32 %s17, 1
    %s19 = scalar_select %p16, %s17, %s18
    %p22 = pneg %p16
    %p23 = scmp.eq.s32.totalorder %s7, 1
    %p24 = por %p22, %p23
    %p25 = scmp.ne.s32.totalorder %s17, %s20
    %p26 = scmp.eq.s32.totalorder %s7, 0
    %p27 = por %p25, %p26
    %p28 = scmp.ne.s32.totalorder %s17, %s20
    %p29 = scmp.eq.s32.totalorder %s12, 1
    %p30 = por %p28, %p29
    %p31 = scmp.ne.s32.totalorder %s20, %s21
    %p32 = scmp.eq.s32.totalorder %s12, 0
    %p33 = por %p31, %p32
    %p34 = scmp.ne.s32.totalorder %s20, %s21
    %p35 = scmp.eq.s32.totalorder %s13, 1
    %p36 = por %p34, %p35
    %p38 = scmp.ne.s32.totalorder %s21, %s37
    %p39 = scmp.eq.s32.totalorder %s13, 0
    %p40 = por %p38, %p39
    %s41 = ssub.s32 %s7, %s14
    %p42 = scmp.eq.s32.totalorder %s41, 0
    %s44 = sadd.s32 %s43, 1
    %s45 = scalar_select %p42, %s43, %s44
    %p48 = pneg %p42
    %p49 = scmp.eq.s32.totalorder %s7, 1
    %p50 = por %p48, %p49
    %p51 = scmp.ne.s32.totalorder %s43, %s46
    %p52 = scmp.eq.s32.totalorder %s7, 0
    %p53 = por %p51, %p52
    %p54 = scmp.ne.s32.totalorder %s43, %s46
    %p55 = scmp.eq.s32.totalorder %s12, 1
    %p56 = por %p54, %p55
    %p57 = scmp.ne.s32.totalorder %s46, %s47
    %p58 = scmp.eq.s32.totalorder %s12, 0
    %p59 = por %p57, %p58
    %p60 = scmp.ne.s32.totalorder %s46, %s47
    %p61 = scmp.eq.s32.totalorder %s13, 1
    %p62 = por %p60, %p61
    %p64 = scmp.ne.s32.totalorder %s47, %s63
    %p65 = scmp.eq.s32.totalorder %s13, 0
    %p66 = por %p64, %p65
    %p67 = scmp.le.s32.totalorder 1, %s7
    %p68 = scmp.lt.s32.totalorder %s7, 3
    %p69 = pnand %p67, %p68
    %p70 = pneg %p69
    // Predicated region
    $region9: #{vrwkv_classification_forward.48} parent=5 // pred_check
      _
    $region10: #{vrwkv_classification_forward.48} parent=5 // pred_check_branch
      %72 = sbr.rel (%p69) target = $region12
    $region11: #{vrwkv_classification_forward.48} parent=5 // pred_region
      %s73 = ssub.s32 %s7, 1
    $region12: #{vrwkv_classification_forward.48} parent=5 // pred_fallthru
      _
    %p74 = scmp.lt.s32.totalorder %s7, 2
    // Predicated region
    $region13: #{vrwkv_classification_forward.48} parent=5 // pred_check
      %p75 = pneg %p74
    $region14: #{vrwkv_classification_forward.48} parent=5 // pred_check_branch
      %77 = sbr.rel (%p75) target = $region16
    $region15: #{vrwkv_classification_forward.48} parent=5 // pred_region
      // Predicated region
      $region17: #{vrwkv_classification_forward.48} parent=15 // pred_check
        %p78 = pneg %p27
      $region18: #{vrwkv_classification_forward.48} parent=15 // pred_check_branch
        %80 = sbr.rel (%p78) target = $region20
      $region19: #{vrwkv_classification_forward.48} parent=15 // pred_region
        %p81 = scmp.lt.s32.totalorder %s7, 1
        %s82 = scalar_select %p81, %s7, 1
        %s83 = smul.addr %s82, 2
        %s84 = smul.addr %s83, 8
        %s85 = scalar_lea.vmem %s0, %s84
      $region20: #{vrwkv_classification_forward.48} parent=15 // pred_fallthru
        _
    $region16: #{vrwkv_classification_forward.48} parent=5 // pred_fallthru
      _
    %p86 = scmp.le.s32.totalorder 1, %s7
    %p87 = scmp.lt.s32.totalorder %s7, 3
    %p88 = pnand %p86, %p87
    %p89 = pneg %p88
    // Predicated region
    $region21: #{vrwkv_classification_forward.48} parent=5 // pred_check
      _
    $region22: #{vrwkv_classification_forward.48} parent=5 // pred_check_branch
      %91 = sbr.rel (%p88) target = $region24
    $region23: #{vrwkv_classification_forward.48} parent=5 // pred_region
      %s92 = ssub.s32 %s7, 1
      %p93 = scmp.lt.s32.totalorder %s12, 1
      %s94 = scalar_select %p93, %s12, 1
      %s95 = smul.addr %s94, 2
      %s96 = smul.addr %s95, 8
      %s97 = scalar_lea.vmem %s0, %s96
      %p98 = pneg %p33
      %p99 = pneg %p30
      %p100 = pneg %p59
      %p101 = pneg %p56
      %p102 = scmp.lt.s32.totalorder %s12, 1
      %s103 = scalar_select %p102, %s12, 1
      %s104 = scalar_lea.vmem %s1, %s103
      %p105 = scmp.lt.s32.totalorder %s12, 1
      %s106 = scalar_select %p105, %s12, 1
      %s107 = smul.addr %s106, 2
      %s108 = smul.addr %s107, 8
      %s109 = scalar_lea.vmem %s0, %s108
      %p110 = scmp.lt.s32.totalorder %s12, 1
      %s111 = scalar_select %p110, %s12, 1
      %s112 = scalar_lea.vmem %s1, %s111
      %v113 = vld [vmem:[%s109] sm:$0xff]
      %v114 = vld [vmem:[%s109 + $0x8] sm:$0xff]
      %vm115 = vcmask 261120
      %v116 = vsel %vm115, %v113, 0.0
      %v117 = vsel %vm115, %v114, 0.0
      %v118 = vadd.f32 %v116, %v117
      %v119 = vrot.slane %v118, 4
      %v120 = vadd.f32 %v118, %v119
      %v121 = vrot.slane %v120, 2
      %v122 = vadd.f32 %v120, %v121
      %v123 = vrot.slane %v122, 1
      %v124 = vadd.f32 %v122, %v123
      %v125 = vrcp.pop 16.0
      %v126 = vmul.f32 16.0, %v125
      %v127 = vsub.f32 1.0, %v126
      %v128 = vmul.f32 %v125, %v127
      %v129 = vadd.f32 %v125, %v128
      %vm130 = vweird.f32 %v125
      %v131 = vsel %vm130, %v125, %v129
      %v132 = vmul.f32 %v124, %v131
      %vm133 = vcmask 253952
      %134 = vst.msk [vmem:[%s112] sm:$0x1] %vm133, %v132
      %p135 = scmp.lt.s32.totalorder %s12, 1
      %s136 = scalar_select %p135, %s12, 1
      %s137 = scalar_lea.vmem %s1, %s136
      // Predicated region
      $region25: #{vrwkv_classification_forward.48} parent=23 // pred_check
        %p138 = pneg %p56
      $region26: #{vrwkv_classification_forward.48} parent=23 // pred_check_branch
        %140 = sbr.rel (%p138) target = $region28
      $region27: #{vrwkv_classification_forward.48} parent=23 // pred_region
        _
      $region28: #{vrwkv_classification_forward.48} parent=23 // pred_fallthru
        _
    $region24: #{vrwkv_classification_forward.48} parent=5 // pred_fallthru
      _
    %p141 = scmp.le.s32.totalorder 2, %s7
    // Predicated region
    $region29: #{vrwkv_classification_forward.48} parent=5 // pred_check
      %p142 = pneg %p141
    $region30: #{vrwkv_classification_forward.48} parent=5 // pred_check_branch
      %144 = sbr.rel (%p142) target = $region32
    $region31: #{vrwkv_classification_forward.48} parent=5 // pred_region
      %s145 = ssub.s32 %s7, 2
      // Predicated region
      $region33: #{vrwkv_classification_forward.48} parent=31 // pred_check
        %p146 = pneg %p62
      $region34: #{vrwkv_classification_forward.48} parent=31 // pred_check_branch
        %148 = sbr.rel (%p146) target = $region36
      $region35: #{vrwkv_classification_forward.48} parent=31 // pred_region
        %p149 = scmp.lt.s32.totalorder %s13, 1
        %s150 = scalar_select %p149, %s13, 1
        %s151 = scalar_lea.vmem %s1, %s150
      $region36: #{vrwkv_classification_forward.48} parent=31 // pred_fallthru
        _
    $region32: #{vrwkv_classification_forward.48} parent=5 // pred_fallthru
      _
  $region6: #{vrwkv_classification_forward.48} parent=0 // loop_footer
    %s11 = sadd.s32 1, %s7
  $region7: #{vrwkv_classification_forward.48} parent=0 // loop_footer_branch
    %6 = sbr.rel target = $region3
  $region8: #{vrwkv_classification_forward.48} parent=0 // loop_exit
    _

// kernel: vrwkv_classification_forward.49
$region0: #{vrwkv_classification_forward.49}
  #allocation0 [shape = 'u32[]', space=smem, size = 0x4, offset = 0x4, fixed_abs, tag = 'smem constant byte address 0x4 - core index']
  #allocation1 [shape = 'u32[72,128]{1,0:T(1,128)}', space=vmem, size = 0x9000, scoped, tag = 'internal scratch']
  #allocation2 [shape = 'f32[2,128]{1,0:T(2,128)}', space=vmem, size = 0x400, scoped, tag = 'scratch operand']
  %s0 = inlined_call_operand.vmem [shape: f32[2,32], index: 0, kind: input, shape index: {}]
  %s1 = inlined_call_operand.vmem [shape: bf16[32,128], index: 1, kind: input, shape index: {}]
  %s2 = inlined_call_operand.vmem [shape: f32[1,128], index: 2, kind: input, shape index: {}]
  %s3 = inlined_call_operand.hbm [shape: f32[2,128], index: 3, kind: output, shape index: {}]
  %s4 = sld [smem:[#allocation0]]
  $region30: #{vrwkv_classification_forward.49} parent=0
    _
  %s6 = ssub.s32 1, %s4
  %s7 = scalar_select 0, %s6, %s4
  $region1: #{vrwkv_classification_forward.49} parent=0
    #allocation3 [shape = 'u8[1024]{0}', space=vmem, size = 0x400, scoped, tag = 'output window, operand 0, single buffered']
    #allocation4 [shape = 's32[1]{0}', space=sflag, size = 0x4, scoped, tag = 'scoped memory for vrwkv_classification_forward.49']
    %8 = vsyncpa [#allocation4], 0
    // Predicated region
    $region2: #{vrwkv_classification_forward.49} parent=1 // pred_check
      _
    $region3: #{vrwkv_classification_forward.49} parent=1 // pred_check_branch
      %10 = sbr.rel (0) target = $region5
    $region4: #{vrwkv_classification_forward.49} parent=1 // pred_region
      _
    $region5: #{vrwkv_classification_forward.49} parent=1 // pred_fallthru
      _
    // Predicated region
    $region6: #{vrwkv_classification_forward.49} parent=1 // pred_check
      _
    $region7: #{vrwkv_classification_forward.49} parent=1 // pred_check_branch
      %12 = sbr.rel (0) target = $region9
    $region8: #{vrwkv_classification_forward.49} parent=1 // pred_region
      _
    $region9: #{vrwkv_classification_forward.49} parent=1 // pred_fallthru
      _
    // Predicated region
    $region10: #{vrwkv_classification_forward.49} parent=1 // pred_check
      _
    $region11: #{vrwkv_classification_forward.49} parent=1 // pred_check_branch
      %14 = sbr.rel (0) target = $region13
    $region12: #{vrwkv_classification_forward.49} parent=1 // pred_region
      _
    $region13: #{vrwkv_classification_forward.49} parent=1 // pred_fallthru
      _
    %p16 = scmp.eq.s32.totalorder 0, 0
    // Predicated region
    $region14: #{vrwkv_classification_forward.49} parent=1 // pred_check
      %p17 = pneg %p16
    $region15: #{vrwkv_classification_forward.49} parent=1 // pred_check_branch
      %19 = sbr.rel (%p17) target = $region17
    $region16: #{vrwkv_classification_forward.49} parent=1 // pred_region
      %20 = vst [vmem:[#allocation2] sm:$0x3] 0.0
    $region17: #{vrwkv_classification_forward.49} parent=1 // pred_fallthru
      _
    %v21 = vld [vmem:[#allocation2] sm:$0x3]
    %v22 = vld [vmem:[%s0] sm:$0x3]
    %v23 = vpack.c.bf16 %v22, %v22
    %v24 = vld [vmem:[%s1] sm:$0xf]
    %v25 = vld [vmem:[%s1 + $0x4] sm:$0xf]
    %v26 = vld [vmem:[%s1 + $0x8] sm:$0xf]
    %v27 = vld [vmem:[%s1 + $0xc] sm:$0xf]
    %v32 = vunpack.c.l.b16 %v24
    %v33 = vunpack.c.l.b16 %v25
    %v34 = vunpack.c.l.b16 %v26
    %v35 = vunpack.c.l.b16 %v27
    %v36 = vpack.c.b16 %v33, %v32
    %v37 = vpack.c.b16 %v35, %v34
    %vm40 = vcmask 261120
    %v42 = vsel %vm40, %v23, 0
    %44 = vmatpush.bf16.msra.mxu0 0
    %45 = vmatpush.bf16.msra.mxu0 0
    %46 = vmatpush.bf16.msra.mxu0 0
    %47 = vmatpush.bf16.msra.mxu0 0
    %48 = vmatpush.bf16.msra.mxu0 0
    %49 = vmatpush.bf16.msra.mxu0 0
    %50 = vmatpush.bf16.msra.mxu0 %v37
    %51 = vmatpush.bf16.msra.mxu0 %v36
    %52 = vmatmul.bf16.gmra.mxu0 %v42
    %v53 = vpop.f32.mrf.mxu0
    %v54 = vadd.f32 0.0, %v53
    %v55 = vpop.f32.mrf.mxu0
    %56 = vdwg.mxu0
    %v57 = vadd.f32 %v21, %v54
    %58 = vst [vmem:[#allocation2] sm:$0x3] %v57
    // Predicated region
    $region18: #{vrwkv_classification_forward.49} parent=1 // pred_check
      %p59 = pneg %p16
    $region19: #{vrwkv_classification_forward.49} parent=1 // pred_check_branch
      %61 = sbr.rel (%p59) target = $region21
    $region20: #{vrwkv_classification_forward.49} parent=1 // pred_region
      %v62 = vld [vmem:[#allocation2] sm:$0x3]
      %v63 = vld [vmem:[%s2] sm:$0x1]
      %v65 = vperm.slane %v63, 0
      %v67 = vadd.f32 %v62, %v65
      %68 = vst [vmem:[#allocation3] sm:$0x3] %v67
    $region21: #{vrwkv_classification_forward.49} parent=1 // pred_fallthru
      _
    // Predicated region
    $region22: #{vrwkv_classification_forward.49} parent=1 // pred_check
      _
    $region23: #{vrwkv_classification_forward.49} parent=1 // pred_check_branch
      %70 = sbr.rel (0) target = $region25
    $region24: #{vrwkv_classification_forward.49} parent=1 // pred_region
      %72 = vsyncadd [#allocation4], 0
      %s74 = sshll.u32 [#allocation3], 4
      %s75 = int_to_ptr.vmem [resolvable:$true] %s74
      %s76 = sshll.u32 %s3, 4
      %s77 = int_to_ptr.hbm [resolvable:$true] %s76
      %79 = dma.vmem_to_hbm [thread:$0]  %s75, 32, %s77, [#allocation4]
    $region25: #{vrwkv_classification_forward.49} parent=1 // pred_fallthru
      _
    // Predicated region
    $region26: #{vrwkv_classification_forward.49} parent=1 // pred_check
      _
    $region27: #{vrwkv_classification_forward.49} parent=1 // pred_check_branch
      %81 = sbr.rel (0) target = $region29
    $region28: #{vrwkv_classification_forward.49} parent=1 // pred_region
      %83 = dma.done [#allocation4], 32
    $region29: #{vrwkv_classification_forward.49} parent=1 // pred_fallthru
      _
    %84 = vsyncpa [#allocation4], 1

</llo_original>
